<compile_context>
chip_gen: v7x
topology: tpu7x:2x2x1
jax: 0.10.0
libtpu: 0.0.40
codegen_flags: <defaults>
</compile_context>

<pallas_src>
import functools

import jax
import jax.numpy as jnp
from jax.experimental import pallas as pl
from jax.experimental.pallas import tpu as pltpu

OBS_DIM = 214
HID = 512
ACT_DIM = 9
ACT_PAD = 128      # lane-dense output head; valid columns are [0, ACT_DIM)


def _round_up(x, m):
    return ((x + m - 1) // m) * m


def actor_kernel(x_ref, w1_ref, w2_ref, w3_ref, wm_ref, bh_ref, bm_ref, out_ref):
    """One batch tile of the full forward pass.

    x_ref : (TB, 214) f32  -> cast to bf16 in-kernel
    w*    : bf16, constant index_map (resident in VMEM across grid steps)
    bh_ref: (3, 512) f32 (rows = b1, b2, b3)   bm_ref: (1, 128) f32
    out_ref: (TB, 128) f32 (valid action lanes are [0, 9))
    """
    x = x_ref[...].astype(jnp.bfloat16)                                # VPU cast

    # K = 214 contraction: Mosaic masks the padded lanes of the last tile.
    h = jnp.dot(x, w1_ref[...], preferred_element_type=jnp.float32)
    h = jnp.maximum(h + bh_ref[0:1, :], 0.0).astype(jnp.bfloat16)

    h = jnp.dot(h, w2_ref[...], preferred_element_type=jnp.float32)
    h = jnp.maximum(h + bh_ref[1:2, :], 0.0).astype(jnp.bfloat16)

    h = jnp.dot(h, w3_ref[...], preferred_element_type=jnp.float32)
    h = jnp.maximum(h + bh_ref[2:3, :], 0.0).astype(jnp.bfloat16)

    m = jnp.dot(h, wm_ref[...], preferred_element_type=jnp.float32) + bm_ref[...]
    out_ref[...] = jnp.tanh(m)                                         # f32 (EUP)


def init_params(key):
    """f32 parameters with the same shapes/semantics as the PyTorch module
    (stored transposed: (in, out), biases as (1, out)); PyTorch default init."""
    keys = jax.random.split(key, 8)

    def linear(kw, kb, fan_in, fan_out):
        bound = 1.0 / jnp.sqrt(fan_in)
        w = jax.random.uniform(kw, (fan_in, fan_out), jnp.float32, -bound, bound)
        b = jax.random.uniform(kb, (1, fan_out), jnp.float32, -bound, bound)
        return w, b

    w1, b1 = linear(keys[0], keys[1], OBS_DIM, HID)
    w2, b2 = linear(keys[2], keys[3], HID, HID)
    w3, b3 = linear(keys[4], keys[5], HID, HID)
    wm, bm = linear(keys[6], keys[7], HID, ACT_DIM)
    return {"w1": w1, "b1": b1, "w2": w2, "b2": b2,
            "w3": w3, "b3": b3, "wm": wm, "bm": bm}


def prepare_params(p):
    """One-time host-side packing: cast weights to bf16, pad the 9-wide head
    to 128 lanes, pack the three hidden biases into one (3, 512) array."""
    wm = jnp.zeros((HID, ACT_PAD), jnp.float32).at[:, :ACT_DIM].set(p["wm"])
    bh = jnp.concatenate([p["b1"], p["b2"], p["b3"]], axis=0)          # (3, HID)
    bm = jnp.zeros((1, ACT_PAD), jnp.float32).at[:, :ACT_DIM].set(p["bm"])
    return {
        "w1": p["w1"].astype(jnp.bfloat16),     # (214, 512) — no K padding needed
        "w2": p["w2"].astype(jnp.bfloat16),
        "w3": p["w3"].astype(jnp.bfloat16),
        "wm": wm.astype(jnp.bfloat16),          # (512, 128)
        "bh": bh,                               # (3, 512) f32
        "bm": bm,                               # (1, 128) f32
    }


@functools.partial(jax.jit, static_argnames=("block_b",))
def actor_forward(obs, prep, block_b=512):
    """obs: (B, 214) f32; prep: output of prepare_params. Returns (B, 9) f32."""
    b = obs.shape[0]

    # Batch tile: >= 2 grid steps whenever B > 8 (both v7x TCs get work under
    # the "parallel" annotation), growing to block_b (512, a 256-multiple that
    # fills the v6e/v7x MXU M dim) at large B.  Always a multiple of 8.
    tb = min(block_b, _round_up(max((b + 1) // 2, 1), 8))
    b_pad = _round_up(b, tb)

    x = obs
    if b_pad != b:
        # Only a tiny pad of the raw obs when B isn't a tile multiple; no
        # full activation copy / cast is materialized in HBM anymore.
        x = jnp.pad(obs, ((0, b_pad - b), (0, 0)))

    grid = (b_pad // tb,)

    def resident(shape):
        # Constant block index => DMA'd once, stays in VMEM across grid steps.
        return pl.BlockSpec(shape, lambda i: (0, 0))

    weight_bytes = 2 * (OBS_DIM * HID + 2 * HID * HID + HID * ACT_PAD)   # bf16
    bias_bytes = 4 * (3 * HID + ACT_PAD)
    io_bytes = b_pad * (OBS_DIM * 4 + ACT_PAD * 4)
    cost = pl.CostEstimate(
        flops=2 * b_pad * (OBS_DIM * HID + 2 * HID * HID + HID * ACT_PAD),
        transcendentals=b_pad * ACT_PAD,
        bytes_accessed=weight_bytes + bias_bytes + io_bytes,
    )

    out = pl.pallas_call(
        actor_kernel,
        out_shape=jax.ShapeDtypeStruct((b_pad, ACT_PAD), jnp.float32),
        grid=grid,
        in_specs=[
            pl.BlockSpec((tb, OBS_DIM), lambda i: (i, 0)),   # obs tile (pipelined)
            resident((OBS_DIM, HID)),                        # w1
            resident((HID, HID)),                            # w2
            resident((HID, HID)),                            # w3
            resident((HID, ACT_PAD)),                        # wm
            resident((3, HID)),                              # b1/b2/b3 packed
            resident((1, ACT_PAD)),                          # bm (padded)
        ],
        out_specs=pl.BlockSpec((tb, ACT_PAD), lambda i: (i, 0)),
        compiler_params=pltpu.CompilerParams(
            dimension_semantics=("parallel",),               # batch across TCs (v7x)
        ),
        cost_estimate=cost,
    )(x, prep["w1"], prep["w2"], prep["w3"], prep["wm"], prep["bh"], prep["bm"])

    return out[:b, :ACT_DIM]


def actor_ref_bf16(obs, p):
    """Pure-JAX reference mirroring the kernel numerics (bf16 matmul inputs,
    f32 accumulation, f32 bias/ReLU/tanh)."""
    def layer(x, w, b, act):
        y = jnp.dot(x.astype(jnp.bfloat16), w.astype(jnp.bfloat16),
                    preferred_element_type=jnp.float32) + b
        return act(y)

    h = layer(obs, p["w1"], p["b1"], jax.nn.relu)
    h = layer(h, p["w2"], p["b2"], jax.nn.relu)
    h = layer(h, p["w3"], p["b3"], jax.nn.relu)
    return layer(h, p["wm"], p["bm"], jnp.tanh)


def actor_ref_f32(obs, p):
    """Full-precision reference (loose check only; kernel uses bf16 weights)."""
    h = jax.nn.relu(obs @ p["w1"] + p["b1"])
    h = jax.nn.relu(h @ p["w2"] + p["b2"])
    h = jax.nn.relu(h @ p["w3"] + p["b3"])
    return jnp.tanh(h @ p["wm"] + p["bm"])


if __name__ == "__main__":
    key = jax.random.PRNGKey(0)
    k_obs, k_params = jax.random.split(key)

    batch = 8
    obs = jax.random.normal(k_obs, (batch, OBS_DIM), dtype=jnp.float32)
    params = init_params(k_params)
    prep = prepare_params(params)

    out = actor_forward(obs, prep)
    out = jax.block_until_ready(out)

    assert out.shape == (batch, ACT_DIM), out.shape

    ref_bf16 = actor_ref_bf16(obs, params)
    assert jnp.allclose(out, ref_bf16, atol=1e-2, rtol=1e-2), \
        "mismatch vs bf16-mirrored JAX reference"

    ref_f32 = actor_ref_f32(obs, params)
    assert jnp.allclose(out, ref_f32, atol=5e-2, rtol=5e-2), \
        "mismatch vs f32 JAX reference"

    print("KERNEL_OK")
</pallas_src>

<mosaic_0001>
module attributes {stable_mosaic.version = 11 : i64} {
  func.func @actor_kernel(%arg0: i32, %arg1: memref<8x214xf32, #tpu.memory_space<vmem>>, %arg2: memref<214x512xbf16, #tpu.memory_space<vmem>>, %arg3: memref<512x512xbf16, #tpu.memory_space<vmem>>, %arg4: memref<512x512xbf16, #tpu.memory_space<vmem>>, %arg5: memref<512x128xbf16, #tpu.memory_space<vmem>>, %arg6: memref<3x512xf32, #tpu.memory_space<vmem>>, %arg7: memref<1x128xf32, #tpu.memory_space<vmem>>, %arg8: memref<8x128xf32, #tpu.memory_space<vmem>>) attributes {dimension_semantics = [#tpu.dimension_semantics<parallel>], iteration_bounds = array<i64: 1>, scalar_prefetch = 0 : i64, scratch_operands = 0 : i64, tpu.core_type = #tpu.core_type<tc>, window_params = [{transform_indices = @transform_0, window_bounds = array<i64: 8, 214>}, {pipeline_mode = #tpu.pipeline_mode<synchronous>, transform_indices = @transform_1, window_bounds = array<i64: 214, 512>}, {pipeline_mode = #tpu.pipeline_mode<synchronous>, transform_indices = @transform_2, window_bounds = array<i64: 512, 512>}, {pipeline_mode = #tpu.pipeline_mode<synchronous>, transform_indices = @transform_3, window_bounds = array<i64: 512, 512>}, {pipeline_mode = #tpu.pipeline_mode<synchronous>, transform_indices = @transform_4, window_bounds = array<i64: 512, 128>}, {pipeline_mode = #tpu.pipeline_mode<synchronous>, transform_indices = @transform_5, window_bounds = array<i64: 3, 512>}, {pipeline_mode = #tpu.pipeline_mode<synchronous>, transform_indices = @transform_6, window_bounds = array<i64: 1, 128>}, {transform_indices = @transform_7, window_bounds = array<i64: 8, 128>}]} {
    %c0 = arith.constant 0 : index
    %c0_0 = arith.constant 0 : index
    %0 = vector.load %arg1[%c0, %c0_0] : memref<8x214xf32, #tpu.memory_space<vmem>>, vector<8x214xf32>
    %1 = arith.truncf %0 : vector<8x214xf32> to vector<8x214xbf16>
    %c0_1 = arith.constant 0 : index
    %c0_2 = arith.constant 0 : index
    %2 = vector.load %arg2[%c0_1, %c0_2] : memref<214x512xbf16, #tpu.memory_space<vmem>>, vector<214x512xbf16>
    %cst = arith.constant dense<0.000000e+00> : vector<8x512xf32>
    %3 = tpu.matmul %1, %2, %cst {dimension_numbers = #tpu.dot_dimension_numbers<[1], [0], [0], [1], [0, 0, 1, 1], [], []>} : vector<8x214xbf16>, vector<214x512xbf16>, vector<8x512xf32> -> vector<8x512xf32>
    %c0_3 = arith.constant 0 : index
    %c0_4 = arith.constant 0 : index
    %4 = vector.load %arg6[%c0_3, %c0_4] : memref<3x512xf32, #tpu.memory_space<vmem>>, vector<1x512xf32>
    %5 = vector.broadcast %4 : vector<1x512xf32> to vector<8x512xf32>
    %6 = arith.addf %3, %5 : vector<8x512xf32>
    %cst_5 = arith.constant 0.000000e+00 : f32
    %7 = vector.broadcast %cst_5 : f32 to vector<8x512xf32>
    %8 = arith.maximumf %6, %7 : vector<8x512xf32>
    %9 = arith.truncf %8 : vector<8x512xf32> to vector<8x512xbf16>
    %c0_6 = arith.constant 0 : index
    %c0_7 = arith.constant 0 : index
    %10 = vector.load %arg3[%c0_6, %c0_7] : memref<512x512xbf16, #tpu.memory_space<vmem>>, vector<512x512xbf16>
    %cst_8 = arith.constant dense<0.000000e+00> : vector<8x512xf32>
    %11 = tpu.matmul %9, %10, %cst_8 {dimension_numbers = #tpu.dot_dimension_numbers<[1], [0], [0], [1], [0, 0, 1, 1], [], []>} : vector<8x512xbf16>, vector<512x512xbf16>, vector<8x512xf32> -> vector<8x512xf32>
    %c1 = arith.constant 1 : index
    %c0_9 = arith.constant 0 : index
    %12 = vector.load %arg6[%c1, %c0_9] : memref<3x512xf32, #tpu.memory_space<vmem>>, vector<1x512xf32>
    %13 = vector.broadcast %12 : vector<1x512xf32> to vector<8x512xf32>
    %14 = arith.addf %11, %13 : vector<8x512xf32>
    %cst_10 = arith.constant 0.000000e+00 : f32
    %15 = vector.broadcast %cst_10 : f32 to vector<8x512xf32>
    %16 = arith.maximumf %14, %15 : vector<8x512xf32>
    %17 = arith.truncf %16 : vector<8x512xf32> to vector<8x512xbf16>
    %c0_11 = arith.constant 0 : index
    %c0_12 = arith.constant 0 : index
    %18 = vector.load %arg4[%c0_11, %c0_12] : memref<512x512xbf16, #tpu.memory_space<vmem>>, vector<512x512xbf16>
    %cst_13 = arith.constant dense<0.000000e+00> : vector<8x512xf32>
    %19 = tpu.matmul %17, %18, %cst_13 {dimension_numbers = #tpu.dot_dimension_numbers<[1], [0], [0], [1], [0, 0, 1, 1], [], []>} : vector<8x512xbf16>, vector<512x512xbf16>, vector<8x512xf32> -> vector<8x512xf32>
    %c2 = arith.constant 2 : index
    %c0_14 = arith.constant 0 : index
    %20 = vector.load %arg6[%c2, %c0_14] : memref<3x512xf32, #tpu.memory_space<vmem>>, vector<1x512xf32>
    %21 = vector.broadcast %20 : vector<1x512xf32> to vector<8x512xf32>
    %22 = arith.addf %19, %21 : vector<8x512xf32>
    %cst_15 = arith.constant 0.000000e+00 : f32
    %23 = vector.broadcast %cst_15 : f32 to vector<8x512xf32>
    %24 = arith.maximumf %22, %23 : vector<8x512xf32>
    %25 = arith.truncf %24 : vector<8x512xf32> to vector<8x512xbf16>
    %c0_16 = arith.constant 0 : index
    %c0_17 = arith.constant 0 : index
    %26 = vector.load %arg5[%c0_16, %c0_17] : memref<512x128xbf16, #tpu.memory_space<vmem>>, vector<512x128xbf16>
    %cst_18 = arith.constant dense<0.000000e+00> : vector<8x128xf32>
    %27 = tpu.matmul %25, %26, %cst_18 {dimension_numbers = #tpu.dot_dimension_numbers<[1], [0], [0], [1], [0, 0, 1, 1], [], []>} : vector<8x512xbf16>, vector<512x128xbf16>, vector<8x128xf32> -> vector<8x128xf32>
    %c0_19 = arith.constant 0 : index
    %c0_20 = arith.constant 0 : index
    %28 = vector.load %arg7[%c0_19, %c0_20] : memref<1x128xf32, #tpu.memory_space<vmem>>, vector<1x128xf32>
    %29 = vector.broadcast %28 : vector<1x128xf32> to vector<8x128xf32>
    %30 = arith.addf %27, %29 : vector<8x128xf32>
    %31 = math.tanh %30 : vector<8x128xf32>
    %c0_21 = arith.constant 0 : index
    %c0_22 = arith.constant 0 : index
    %32 = vector.load %arg8[%c0_21, %c0_22] : memref<8x128xf32, #tpu.memory_space<vmem>>, vector<8x128xf32>
    tpu.vector_store %arg8[%c0_21, %c0_22], %31 {strides = array<i32>} : memref<8x128xf32, #tpu.memory_space<vmem>>, vector<8x128xf32>,
    return
  }
  func.func @transform_0(%arg0: i32) -> (i32, i32) {
    %c0_i32 = arith.constant 0 : i32
    %c0_i32_0 = arith.constant 0 : i32
    return %arg0, %c0_i32 : i32, i32
  }
  func.func @transform_1(%arg0: i32) -> (i32, i32) {
    %c0_i32 = arith.constant 0 : i32
    %c0_i32_0 = arith.constant 0 : i32
    %c0_i32_1 = arith.constant 0 : i32
    return %c0_i32, %c0_i32_0 : i32, i32
  }
  func.func @transform_2(%arg0: i32) -> (i32, i32) {
    %c0_i32 = arith.constant 0 : i32
    %c0_i32_0 = arith.constant 0 : i32
    %c0_i32_1 = arith.constant 0 : i32
    return %c0_i32, %c0_i32_0 : i32, i32
  }
  func.func @transform_3(%arg0: i32) -> (i32, i32) {
    %c0_i32 = arith.constant 0 : i32
    %c0_i32_0 = arith.constant 0 : i32
    %c0_i32_1 = arith.constant 0 : i32
    return %c0_i32, %c0_i32_0 : i32, i32
  }
  func.func @transform_4(%arg0: i32) -> (i32, i32) {
    %c0_i32 = arith.constant 0 : i32
    %c0_i32_0 = arith.constant 0 : i32
    %c0_i32_1 = arith.constant 0 : i32
    return %c0_i32, %c0_i32_0 : i32, i32
  }
  func.func @transform_5(%arg0: i32) -> (i32, i32) {
    %c0_i32 = arith.constant 0 : i32
    %c0_i32_0 = arith.constant 0 : i32
    %c0_i32_1 = arith.constant 0 : i32
    return %c0_i32, %c0_i32_0 : i32, i32
  }
  func.func @transform_6(%arg0: i32) -> (i32, i32) {
    %c0_i32 = arith.constant 0 : i32
    %c0_i32_0 = arith.constant 0 : i32
    %c0_i32_1 = arith.constant 0 : i32
    return %c0_i32, %c0_i32_0 : i32, i32
  }
  func.func @transform_7(%arg0: i32) -> (i32, i32) {
    %c0_i32 = arith.constant 0 : i32
    %c0_i32_0 = arith.constant 0 : i32
    return %arg0, %c0_i32 : i32, i32
  }
}

</mosaic_0001>

<llo_original>
// kernel: actor_forward.1
$region0: #{actor_forward.1}
  #allocation0 [shape = 'u32[]', space=smem, size = 0x4, offset = 0x4, fixed_abs, tag = 'smem constant byte address 0x4 - core index']
  #allocation1 [shape = 'u32[144,128]{1,0:T(1,128)}', space=vmem, size = 0x12000, scoped, tag = 'internal scratch']
  %s0 = inlined_call_operand.hbm [shape: f32[8,214], index: 0, kind: input, shape index: {}]
  %s1 = inlined_call_operand.hbm [shape: bf16[214,512], index: 1, kind: input, shape index: {}]
  %s2 = inlined_call_operand.hbm [shape: bf16[512,512], index: 2, kind: input, shape index: {}]
  %s3 = inlined_call_operand.hbm [shape: bf16[512,512], index: 3, kind: input, shape index: {}]
  %s4 = inlined_call_operand.hbm [shape: bf16[512,128], index: 4, kind: input, shape index: {}]
  %s5 = inlined_call_operand.hbm [shape: f32[3,512], index: 5, kind: input, shape index: {}]
  %s6 = inlined_call_operand.vmem [shape: f32[1,128], index: 6, kind: input, shape index: {}]
  %s7 = inlined_call_operand.hbm [shape: f32[8,128], index: 7, kind: output, shape index: {}]
  %s8 = sld [smem:[#allocation0]]
  $region62: #{actor_forward.1} parent=0
    _
  %s10 = ssub.s32 1, %s8
  %s11 = scalar_select 0, %s10, %s8
  $region1: #{actor_forward.1} parent=0
    #allocation2 [shape = 'u8[8192]{0}', space=vmem, size = 0x2000, scoped, tag = 'input window, operand 0, single buffered']
    #allocation3 [shape = 's32[1]{0}', space=sflag, size = 0x4, scoped, tag = 'scoped memory for actor_forward.1']
    #allocation4 [shape = 's32[1]{0}', space=sflag, size = 0x4, scoped, tag = 'scoped memory for actor_forward.1']
    #allocation5 [shape = 'u8[221184]{0}', space=vmem, size = 0x36000, scoped, tag = 'input window, operand 1, single buffered']
    #allocation6 [shape = 's32[1]{0}', space=sflag, size = 0x4, scoped, tag = 'scoped memory for actor_forward.1']
    #allocation7 [shape = 'u8[524288]{0}', space=vmem, size = 0x80000, scoped, tag = 'input window, operand 2, single buffered']
    #allocation8 [shape = 'u8[524288]{0}', space=vmem, size = 0x80000, scoped, tag = 'input window, operand 3, single buffered']
    #allocation9 [shape = 's32[1]{0}', space=sflag, size = 0x4, scoped, tag = 'scoped memory for actor_forward.1']
    #allocation10 [shape = 'u8[131072]{0}', space=vmem, size = 0x20000, scoped, tag = 'input window, operand 4, single buffered']
    #allocation11 [shape = 'u8[8192]{0}', space=vmem, size = 0x2000, scoped, tag = 'input window, operand 5, single buffered']
    #allocation12 [shape = 's32[1]{0}', space=sflag, size = 0x4, scoped, tag = 'scoped memory for actor_forward.1']
    #allocation13 [shape = 'u8[4096]{0}', space=vmem, size = 0x1000, scoped, tag = 'output window, operand 0, single buffered']
    %12 = vsyncpa [#allocation3], 0
    %13 = vsyncpa [#allocation6], 0
    %14 = vsyncpa [#allocation9], 0
    %15 = vsyncpa [#allocation12], 0
    %16 = vsyncpa [#allocation4], 0
    // Predicated region
    $region2: #{actor_forward.1} parent=1 // pred_check
      _
    $region3: #{actor_forward.1} parent=1 // pred_check_branch
      %18 = sbr.rel (0) target = $region5
    $region4: #{actor_forward.1} parent=1 // pred_region
      %s20 = ssub.s32 256, 256
      %21 = vsyncadd [#allocation3], %s20
      %s23 = sshll.u32 [#allocation2], 4
      %s24 = int_to_ptr.vmem [resolvable:$true] %s23
      %26 = dma.hbm_to_vmem [thread:$0]  %s0, 256, %s24, [#allocation3]
    $region5: #{actor_forward.1} parent=1 // pred_fallthru
      _
    // Predicated region
    $region6: #{actor_forward.1} parent=1 // pred_check
      _
    $region7: #{actor_forward.1} parent=1 // pred_check_branch
      %28 = sbr.rel (0) target = $region9
    $region8: #{actor_forward.1} parent=1 // pred_region
      %s30 = ssub.s32 6912, 6912
      %31 = vsyncadd [#allocation6], %s30
      %s32 = sshll.u32 [#allocation5], 4
      %s33 = int_to_ptr.vmem [resolvable:$true] %s32
      %38 = dma.hbm_to_vmem [thread:$0]  %s1, 6912, %s33, [#allocation6], 256, 256, 16
    $region9: #{actor_forward.1} parent=1 // pred_fallthru
      _
    // Predicated region
    $region10: #{actor_forward.1} parent=1 // pred_check
      _
    $region11: #{actor_forward.1} parent=1 // pred_check_branch
      %40 = sbr.rel (0) target = $region13
    $region12: #{actor_forward.1} parent=1 // pred_region
      %s42 = ssub.s32 16384, 16384
      %43 = vsyncadd [#allocation6], %s42
      %s44 = sshll.u32 [#allocation7], 4
      %s45 = int_to_ptr.vmem [resolvable:$true] %s44
      %50 = dma.hbm_to_vmem [thread:$0]  %s2, 16384, %s45, [#allocation6], 256, 256, 16
    $region13: #{actor_forward.1} parent=1 // pred_fallthru
      _
    // Predicated region
    $region14: #{actor_forward.1} parent=1 // pred_check
      _
    $region15: #{actor_forward.1} parent=1 // pred_check_branch
      %52 = sbr.rel (0) target = $region17
    $region16: #{actor_forward.1} parent=1 // pred_region
      %s54 = ssub.s32 16384, 16384
      %55 = vsyncadd [#allocation9], %s54
      %s56 = sshll.u32 [#allocation8], 4
      %s57 = int_to_ptr.vmem [resolvable:$true] %s56
      %62 = dma.hbm_to_vmem [thread:$0]  %s3, 16384, %s57, [#allocation9], 256, 256, 16
    $region17: #{actor_forward.1} parent=1 // pred_fallthru
      _
    // Predicated region
    $region18: #{actor_forward.1} parent=1 // pred_check
      _
    $region19: #{actor_forward.1} parent=1 // pred_check_branch
      %64 = sbr.rel (0) target = $region21
    $region20: #{actor_forward.1} parent=1 // pred_region
      %s66 = ssub.s32 4096, 4096
      %67 = vsyncadd [#allocation9], %s66
      %s68 = sshll.u32 [#allocation10], 4
      %s69 = int_to_ptr.vmem [resolvable:$true] %s68
      %74 = dma.hbm_to_vmem [thread:$0]  %s4, 4096, %s69, [#allocation9], 64, 64, 4
    $region21: #{actor_forward.1} parent=1 // pred_fallthru
      _
    // Predicated region
    $region22: #{actor_forward.1} parent=1 // pred_check
      _
    $region23: #{actor_forward.1} parent=1 // pred_check_branch
      %76 = sbr.rel (0) target = $region25
    $region24: #{actor_forward.1} parent=1 // pred_region
      %s78 = ssub.s32 256, 256
      %79 = vsyncadd [#allocation12], %s78
      %s81 = sshll.u32 [#allocation11], 4
      %s82 = int_to_ptr.vmem [resolvable:$true] %s81
      %84 = dma.hbm_to_vmem [thread:$0]  %s5, 256, %s82, [#allocation12]
    $region25: #{actor_forward.1} parent=1 // pred_fallthru
      _
    // Predicated region
    $region26: #{actor_forward.1} parent=1 // pred_check
      _
    $region27: #{actor_forward.1} parent=1 // pred_check_branch
      %86 = sbr.rel (0) target = $region29
    $region28: #{actor_forward.1} parent=1 // pred_region
      _
    $region29: #{actor_forward.1} parent=1 // pred_fallthru
      _
    // Predicated region
    $region30: #{actor_forward.1} parent=1 // pred_check
      _
    $region31: #{actor_forward.1} parent=1 // pred_check_branch
      %88 = sbr.rel (0) target = $region33
    $region32: #{actor_forward.1} parent=1 // pred_region
      %89 = dma.done [#allocation3], 256
    $region33: #{actor_forward.1} parent=1 // pred_fallthru
      _
    // Predicated region
    $region34: #{actor_forward.1} parent=1 // pred_check
      _
    $region35: #{actor_forward.1} parent=1 // pred_check_branch
      %91 = sbr.rel (0) target = $region37
    $region36: #{actor_forward.1} parent=1 // pred_region
      %92 = dma.done [#allocation6], 6912
    $region37: #{actor_forward.1} parent=1 // pred_fallthru
      _
    // Predicated region
    $region38: #{actor_forward.1} parent=1 // pred_check
      _
    $region39: #{actor_forward.1} parent=1 // pred_check_branch
      %94 = sbr.rel (0) target = $region41
    $region40: #{actor_forward.1} parent=1 // pred_region
      %95 = dma.done [#allocation6], 16384
    $region41: #{actor_forward.1} parent=1 // pred_fallthru
      _
    // Predicated region
    $region42: #{actor_forward.1} parent=1 // pred_check
      _
    $region43: #{actor_forward.1} parent=1 // pred_check_branch
      %97 = sbr.rel (0) target = $region45
    $region44: #{actor_forward.1} parent=1 // pred_region
      %98 = dma.done [#allocation9], 16384
    $region45: #{actor_forward.1} parent=1 // pred_fallthru
      _
    // Predicated region
    $region46: #{actor_forward.1} parent=1 // pred_check
      _
    $region47: #{actor_forward.1} parent=1 // pred_check_branch
      %100 = sbr.rel (0) target = $region49
    $region48: #{actor_forward.1} parent=1 // pred_region
      %101 = dma.done [#allocation9], 4096
    $region49: #{actor_forward.1} parent=1 // pred_fallthru
      _
    // Predicated region
    $region50: #{actor_forward.1} parent=1 // pred_check
      _
    $region51: #{actor_forward.1} parent=1 // pred_check_branch
      %103 = sbr.rel (0) target = $region53
    $region52: #{actor_forward.1} parent=1 // pred_region
      %104 = dma.done [#allocation12], 256
    $region53: #{actor_forward.1} parent=1 // pred_fallthru
      _
    %v106 = vld [vmem:[#allocation2] sm:$0xff]
    %v107 = vld [vmem:[#allocation2 + $0x8] sm:$0xff]
    %v108 = vpack.c.bf16 %v106, %v106
    %v109 = vpack.c.bf16 %v107, %v107
    %v110 = vld [vmem:[#allocation5] sm:$0xff]
    %v111 = vld [vmem:[#allocation5 + $0x8] sm:$0xff]
    %v112 = vld [vmem:[#allocation5 + $0x10] sm:$0xff]
    %v113 = vld [vmem:[#allocation5 + $0x18] sm:$0xff]
    %v114 = vld [vmem:[#allocation5 + $0x20] sm:$0xff]
    %v115 = vld [vmem:[#allocation5 + $0x28] sm:$0xff]
    %v116 = vld [vmem:[#allocation5 + $0x30] sm:$0xff]
    %v117 = vld [vmem:[#allocation5 + $0x38] sm:$0xff]
    %v118 = vld [vmem:[#allocation5 + $0x40] sm:$0xff]
    %v119 = vld [vmem:[#allocation5 + $0x48] sm:$0xff]
    %v120 = vld [vmem:[#allocation5 + $0x50] sm:$0xff]
    %v121 = vld [vmem:[#allocation5 + $0x58] sm:$0xff]
    %v122 = vld [vmem:[#allocation5 + $0x60] sm:$0xff]
    %v123 = vld [vmem:[#allocation5 + $0x68] sm:$0xff]
    %v124 = vld [vmem:[#allocation5 + $0x70] sm:$0xff]
    %v125 = vld [vmem:[#allocation5 + $0x78] sm:$0xff]
    %v126 = vld [vmem:[#allocation5 + $0x80] sm:$0xff]
    %v127 = vld [vmem:[#allocation5 + $0x88] sm:$0xff]
    %v128 = vld [vmem:[#allocation5 + $0x90] sm:$0xff]
    %v129 = vld [vmem:[#allocation5 + $0x98] sm:$0xff]
    %v130 = vld [vmem:[#allocation5 + $0xa0] sm:$0xff]
    %v131 = vld [vmem:[#allocation5 + $0xa8] sm:$0xff]
    %v132 = vld [vmem:[#allocation5 + $0xb0] sm:$0xff]
    %v133 = vld [vmem:[#allocation5 + $0xb8] sm:$0xff]
    %v134 = vld [vmem:[#allocation5 + $0xc0] sm:$0xff]
    %v135 = vld [vmem:[#allocation5 + $0xc8] sm:$0xff]
    %v136 = vld [vmem:[#allocation5 + $0xd0] sm:$0xff]
    %v137 = vld [vmem:[#allocation5 + $0xd8] sm:$0xff]
    %v138 = vld [vmem:[#allocation5 + $0xe0] sm:$0xff]
    %v139 = vld [vmem:[#allocation5 + $0xe8] sm:$0xff]
    %v140 = vld [vmem:[#allocation5 + $0xf0] sm:$0xff]
    %v141 = vld [vmem:[#allocation5 + $0xf8] sm:$0xff]
    %v142 = vld [vmem:[#allocation5 + $0x100] sm:$0xff]
    %v143 = vld [vmem:[#allocation5 + $0x108] sm:$0xff]
    %v144 = vld [vmem:[#allocation5 + $0x110] sm:$0xff]
    %v145 = vld [vmem:[#allocation5 + $0x118] sm:$0xff]
    %v146 = vld [vmem:[#allocation5 + $0x120] sm:$0xff]
    %v147 = vld [vmem:[#allocation5 + $0x128] sm:$0xff]
    %v148 = vld [vmem:[#allocation5 + $0x130] sm:$0xff]
    %v149 = vld [vmem:[#allocation5 + $0x138] sm:$0xff]
    %v150 = vld [vmem:[#allocation5 + $0x140] sm:$0xff]
    %v151 = vld [vmem:[#allocation5 + $0x148] sm:$0xff]
    %v152 = vld [vmem:[#allocation5 + $0x150] sm:$0xff]
    %v153 = vld [vmem:[#allocation5 + $0x158] sm:$0xff]
    %v154 = vld [vmem:[#allocation5 + $0x160] sm:$0xff]
    %v155 = vld [vmem:[#allocation5 + $0x168] sm:$0xff]
    %v156 = vld [vmem:[#allocation5 + $0x170] sm:$0xff]
    %v157 = vld [vmem:[#allocation5 + $0x178] sm:$0xff]
    %v158 = vld [vmem:[#allocation5 + $0x180] sm:$0xff]
    %v159 = vld [vmem:[#allocation5 + $0x188] sm:$0xff]
    %v160 = vld [vmem:[#allocation5 + $0x190] sm:$0xff]
    %v161 = vld [vmem:[#allocation5 + $0x198] sm:$0xff]
    %v162 = vld [vmem:[#allocation5 + $0x1a0] sm:$0x77]
    %v163 = vld [vmem:[#allocation5 + $0x1a8] sm:$0x77]
    %v164 = vld [vmem:[#allocation11] ss:$4 sm:$0xf]
    %v166 = vlaneseq
    %v167 = vshrl.u32 %v166, 7
    %v168 = vsub.s32 0, %v167
    %v169 = vrot.slane %v164, %v168
    %v170 = vlaneseq
    %v171 = vshrl.u32 %v170, 7
    %v172 = vsub.s32 1, %v171
    %v173 = vrot.slane %v164, %v172
    %v174 = vlaneseq
    %v175 = vshrl.u32 %v174, 7
    %v176 = vsub.s32 2, %v175
    %v177 = vrot.slane %v164, %v176
    %v178 = vlaneseq
    %v179 = vshrl.u32 %v178, 7
    %v180 = vsub.s32 3, %v179
    %v181 = vrot.slane %v164, %v180
    %v240 = vunpack.c.l.b16 %v110
    %v241 = vunpack.c.h.b16 %v110
    %v242 = vunpack.c.l.b16 %v111
    %v243 = vunpack.c.h.b16 %v111
    %v244 = vunpack.c.l.b16 %v112
    %v245 = vunpack.c.h.b16 %v112
    %v246 = vunpack.c.l.b16 %v113
    %v247 = vunpack.c.h.b16 %v113
    %v248 = vunpack.c.l.b16 %v114
    %v249 = vunpack.c.h.b16 %v114
    %v250 = vunpack.c.l.b16 %v115
    %v251 = vunpack.c.h.b16 %v115
    %v252 = vunpack.c.l.b16 %v116
    %v253 = vunpack.c.h.b16 %v116
    %v254 = vunpack.c.l.b16 %v117
    %v255 = vunpack.c.h.b16 %v117
    %v256 = vunpack.c.l.b16 %v118
    %v257 = vunpack.c.h.b16 %v118
    %v258 = vunpack.c.l.b16 %v119
    %v259 = vunpack.c.h.b16 %v119
    %v260 = vunpack.c.l.b16 %v120
    %v261 = vunpack.c.h.b16 %v120
    %v262 = vunpack.c.l.b16 %v121
    %v263 = vunpack.c.h.b16 %v121
    %v264 = vunpack.c.l.b16 %v122
    %v265 = vunpack.c.h.b16 %v122
    %v266 = vunpack.c.l.b16 %v123
    %v267 = vunpack.c.h.b16 %v123
    %v268 = vunpack.c.l.b16 %v124
    %v269 = vunpack.c.h.b16 %v124
    %v270 = vunpack.c.l.b16 %v125
    %v271 = vunpack.c.h.b16 %v125
    %v272 = vunpack.c.l.b16 %v126
    %v273 = vunpack.c.h.b16 %v126
    %v274 = vunpack.c.l.b16 %v127
    %v275 = vunpack.c.h.b16 %v127
    %v276 = vunpack.c.l.b16 %v128
    %v277 = vunpack.c.h.b16 %v128
    %v278 = vunpack.c.l.b16 %v129
    %v279 = vunpack.c.h.b16 %v129
    %v280 = vunpack.c.l.b16 %v130
    %v281 = vunpack.c.h.b16 %v130
    %v282 = vunpack.c.l.b16 %v131
    %v283 = vunpack.c.h.b16 %v131
    %v284 = vunpack.c.l.b16 %v132
    %v285 = vunpack.c.h.b16 %v132
    %v286 = vunpack.c.l.b16 %v133
    %v287 = vunpack.c.h.b16 %v133
    %v288 = vunpack.c.l.b16 %v134
    %v289 = vunpack.c.h.b16 %v134
    %v290 = vunpack.c.l.b16 %v135
    %v291 = vunpack.c.h.b16 %v135
    %v292 = vunpack.c.l.b16 %v136
    %v293 = vunpack.c.h.b16 %v136
    %v294 = vunpack.c.l.b16 %v137
    %v295 = vunpack.c.h.b16 %v137
    %v296 = vunpack.c.l.b16 %v138
    %v297 = vunpack.c.h.b16 %v138
    %v298 = vunpack.c.l.b16 %v139
    %v299 = vunpack.c.h.b16 %v139
    %v300 = vunpack.c.l.b16 %v140
    %v301 = vunpack.c.h.b16 %v140
    %v302 = vunpack.c.l.b16 %v141
    %v303 = vunpack.c.h.b16 %v141
    %v304 = vunpack.c.l.b16 %v142
    %v305 = vunpack.c.h.b16 %v142
    %v306 = vunpack.c.l.b16 %v143
    %v307 = vunpack.c.h.b16 %v143
    %v308 = vunpack.c.l.b16 %v144
    %v309 = vunpack.c.h.b16 %v144
    %v310 = vunpack.c.l.b16 %v145
    %v311 = vunpack.c.h.b16 %v145
    %v312 = vunpack.c.l.b16 %v146
    %v313 = vunpack.c.h.b16 %v146
    %v314 = vunpack.c.l.b16 %v147
    %v315 = vunpack.c.h.b16 %v147
    %v316 = vunpack.c.l.b16 %v148
    %v317 = vunpack.c.h.b16 %v148
    %v318 = vunpack.c.l.b16 %v149
    %v319 = vunpack.c.h.b16 %v149
    %v320 = vunpack.c.l.b16 %v150
    %v321 = vunpack.c.h.b16 %v150
    %v322 = vunpack.c.l.b16 %v151
    %v323 = vunpack.c.h.b16 %v151
    %v324 = vunpack.c.l.b16 %v152
    %v325 = vunpack.c.h.b16 %v152
    %v326 = vunpack.c.l.b16 %v153
    %v327 = vunpack.c.h.b16 %v153
    %v328 = vunpack.c.l.b16 %v154
    %v329 = vunpack.c.h.b16 %v154
    %v330 = vunpack.c.l.b16 %v155
    %v331 = vunpack.c.h.b16 %v155
    %v332 = vunpack.c.l.b16 %v156
    %v333 = vunpack.c.h.b16 %v156
    %v334 = vunpack.c.l.b16 %v157
    %v335 = vunpack.c.h.b16 %v157
    %v336 = vunpack.c.l.b16 %v158
    %v337 = vunpack.c.h.b16 %v158
    %v338 = vunpack.c.l.b16 %v159
    %v339 = vunpack.c.h.b16 %v159
    %v340 = vunpack.c.l.b16 %v160
    %v341 = vunpack.c.h.b16 %v160
    %v342 = vunpack.c.l.b16 %v161
    %v343 = vunpack.c.h.b16 %v161
    %v344 = vunpack.c.l.b16 %v162
    %v345 = vunpack.c.h.b16 %v162
    %v346 = vunpack.c.l.b16 %v163
    %v347 = vunpack.c.h.b16 %v163
    %v348 = vpack.c.b16 %v244, %v240
    %v349 = vpack.c.b16 %v245, %v241
    %v350 = vpack.c.b16 %v246, %v242
    %v351 = vpack.c.b16 %v247, %v243
    %v352 = vpack.c.b16 %v252, %v248
    %v353 = vpack.c.b16 %v253, %v249
    %v354 = vpack.c.b16 %v254, %v250
    %v355 = vpack.c.b16 %v255, %v251
    %v356 = vpack.c.b16 %v260, %v256
    %v357 = vpack.c.b16 %v261, %v257
    %v358 = vpack.c.b16 %v262, %v258
    %v359 = vpack.c.b16 %v263, %v259
    %v360 = vpack.c.b16 %v268, %v264
    %v361 = vpack.c.b16 %v269, %v265
    %v362 = vpack.c.b16 %v270, %v266
    %v363 = vpack.c.b16 %v271, %v267
    %v364 = vpack.c.b16 %v276, %v272
    %v365 = vpack.c.b16 %v277, %v273
    %v366 = vpack.c.b16 %v278, %v274
    %v367 = vpack.c.b16 %v279, %v275
    %v368 = vpack.c.b16 %v284, %v280
    %v369 = vpack.c.b16 %v285, %v281
    %v370 = vpack.c.b16 %v286, %v282
    %v371 = vpack.c.b16 %v287, %v283
    %v372 = vpack.c.b16 %v292, %v288
    %v373 = vpack.c.b16 %v293, %v289
    %v374 = vpack.c.b16 %v294, %v290
    %v375 = vpack.c.b16 %v295, %v291
    %v376 = vpack.c.b16 %v300, %v296
    %v377 = vpack.c.b16 %v301, %v297
    %v378 = vpack.c.b16 %v302, %v298
    %v379 = vpack.c.b16 %v303, %v299
    %v380 = vpack.c.b16 %v308, %v304
    %v381 = vpack.c.b16 %v309, %v305
    %v382 = vpack.c.b16 %v310, %v306
    %v383 = vpack.c.b16 %v311, %v307
    %v384 = vpack.c.b16 %v316, %v312
    %v385 = vpack.c.b16 %v317, %v313
    %v386 = vpack.c.b16 %v318, %v314
    %v387 = vpack.c.b16 %v319, %v315
    %v388 = vpack.c.b16 %v324, %v320
    %v389 = vpack.c.b16 %v325, %v321
    %v390 = vpack.c.b16 %v326, %v322
    %v391 = vpack.c.b16 %v327, %v323
    %v392 = vpack.c.b16 %v332, %v328
    %v393 = vpack.c.b16 %v333, %v329
    %v394 = vpack.c.b16 %v334, %v330
    %v395 = vpack.c.b16 %v335, %v331
    %v396 = vpack.c.b16 %v340, %v336
    %v397 = vpack.c.b16 %v341, %v337
    %v398 = vpack.c.b16 %v342, %v338
    %v399 = vpack.c.b16 %v343, %v339
    %v400 = vpack.c.b16 %v344, %v344
    %v401 = vpack.c.b16 %v345, %v345
    %v402 = vpack.c.b16 %v346, %v346
    %v403 = vpack.c.b16 %v347, %v347
    %vm456 = vcmask 703488
    %v458 = vsel %vm456, %v109, 0
    %vm460 = vcmask 1042432
    %v462 = vsel %vm460, %v400, 0
    %v465 = vsel %vm460, %v401, 0
    %v468 = vsel %vm460, %v402, 0
    %v471 = vsel %vm460, %v403, 0
    %473 = vmatprep.subr.bf16.mxu0 %v349
    %474 = vmatpush1.bf16.msra.mxu0 %v348
    %475 = vmatprep.subr.bf16.mxu0 %v353
    %476 = vmatpush1.bf16.msra.mxu0 %v352
    %477 = vmatprep.subr.bf16.mxu0 %v357
    %478 = vmatpush1.bf16.msra.mxu0 %v356
    %479 = vmatprep.subr.bf16.mxu0 %v361
    %480 = vmatpush1.bf16.msra.mxu0 %v360
    %481 = vmatprep.subr.bf16.mxu0 %v365
    %482 = vmatpush1.bf16.msra.mxu0 %v364
    %483 = vmatprep.subr.bf16.mxu0 %v369
    %484 = vmatpush1.bf16.msra.mxu0 %v368
    %485 = vmatprep.subr.bf16.mxu0 %v373
    %486 = vmatpush1.bf16.msra.mxu0 %v372
    %487 = vmatprep.subr.bf16.mxu0 %v377
    %488 = vmatpush1.bf16.msra.mxu0 %v376
    %489 = vmatprep.subr.bf16.mxu0 %v381
    %490 = vmatpush1.bf16.msra.mxu0 %v380
    %491 = vmatprep.subr.bf16.mxu0 %v385
    %492 = vmatpush1.bf16.msra.mxu0 %v384
    %493 = vmatprep.subr.bf16.mxu0 %v389
    %494 = vmatpush1.bf16.msra.mxu0 %v388
    %495 = vmatprep.subr.bf16.mxu0 %v393
    %496 = vmatpush1.bf16.msra.mxu0 %v392
    %497 = vmatprep.subr.bf16.mxu0 %v397
    %498 = vmatpush1.bf16.msra.mxu0 %v396
    %499 = vmatprep.subr.bf16.mxu0 %v465
    %500 = vmatpush1.bf16.msra.mxu0 %v462
    %501 = vmatprep.subr.bf16.mxu0 0
    %502 = vmatpush1.bf16.msra.mxu0 0
    %503 = vmatprep.subr.bf16.mxu0 0
    %504 = vmatpush1.bf16.msra.mxu0 0
    %505 = vmatprep.mubr.bf16.mxu0 %v458
    %506 = vmatmul.mubr.bf16.gmra.mrb[0].mxu0 %v108
    %v507 = vpop.f32.mrb[0].mxu0
    %v508 = vadd.f32 %v169, %v507
    %v509 = vpop.f32.mrb[0].mxu0
    %v510 = vadd.f32 %v173, %v509
    %v511 = vpop.f32.mrb[0].mxu0
    %v512 = vpop.f32.mrb[0].mxu0
    %513 = vdwg.mxu0
    %514 = vmatprep.subr.bf16.mxu0 %v351
    %515 = vmatpush1.bf16.msra.mxu0 %v350
    %516 = vmatprep.subr.bf16.mxu0 %v355
    %517 = vmatpush1.bf16.msra.mxu0 %v354
    %518 = vmatprep.subr.bf16.mxu0 %v359
    %519 = vmatpush1.bf16.msra.mxu0 %v358
    %520 = vmatprep.subr.bf16.mxu0 %v363
    %521 = vmatpush1.bf16.msra.mxu0 %v362
    %522 = vmatprep.subr.bf16.mxu0 %v367
    %523 = vmatpush1.bf16.msra.mxu0 %v366
    %524 = vmatprep.subr.bf16.mxu0 %v371
    %525 = vmatpush1.bf16.msra.mxu0 %v370
    %526 = vmatprep.subr.bf16.mxu0 %v375
    %527 = vmatpush1.bf16.msra.mxu0 %v374
    %528 = vmatprep.subr.bf16.mxu0 %v379
    %529 = vmatpush1.bf16.msra.mxu0 %v378
    %530 = vmatprep.subr.bf16.mxu0 %v383
    %531 = vmatpush1.bf16.msra.mxu0 %v382
    %532 = vmatprep.subr.bf16.mxu0 %v387
    %533 = vmatpush1.bf16.msra.mxu0 %v386
    %534 = vmatprep.subr.bf16.mxu0 %v391
    %535 = vmatpush1.bf16.msra.mxu0 %v390
    %536 = vmatprep.subr.bf16.mxu0 %v395
    %537 = vmatpush1.bf16.msra.mxu0 %v394
    %538 = vmatprep.subr.bf16.mxu0 %v399
    %539 = vmatpush1.bf16.msra.mxu0 %v398
    %540 = vmatprep.subr.bf16.mxu0 %v471
    %541 = vmatpush1.bf16.msra.mxu0 %v468
    %542 = vmatprep.subr.bf16.mxu0 0
    %543 = vmatpush1.bf16.msra.mxu0 0
    %544 = vmatprep.subr.bf16.mxu0 0
    %545 = vmatpush1.bf16.msra.mxu0 0
    %546 = vmatprep.mubr.bf16.mxu0 %v458
    %547 = vmatmul.mubr.bf16.gmra.mrb[0].mxu0 %v108
    %v548 = vpop.f32.mrb[0].mxu0
    %v549 = vadd.f32 %v177, %v548
    %v550 = vpop.f32.mrb[0].mxu0
    %v551 = vadd.f32 %v181, %v550
    %v552 = vpop.f32.mrb[0].mxu0
    %v553 = vpop.f32.mrb[0].mxu0
    %554 = vdwg.mxu0
    %v555 = vmax.f32 %v508, 0.0
    %v556 = vmax.f32 %v510, 0.0
    %v557 = vmax.f32 %v549, 0.0
    %v558 = vmax.f32 %v551, 0.0
    %v559 = vpack.c.bf16 %v555, %v555
    %v560 = vpack.c.bf16 %v556, %v556
    %v561 = vpack.c.bf16 %v557, %v557
    %v562 = vpack.c.bf16 %v558, %v558
    %v563 = vld [vmem:[#allocation7] sm:$0xff]
    %v564 = vld [vmem:[#allocation7 + $0x8] sm:$0xff]
    %v565 = vld [vmem:[#allocation7 + $0x10] sm:$0xff]
    %v566 = vld [vmem:[#allocation7 + $0x18] sm:$0xff]
    %v567 = vld [vmem:[#allocation7 + $0x20] sm:$0xff]
    %v568 = vld [vmem:[#allocation7 + $0x28] sm:$0xff]
    %v569 = vld [vmem:[#allocation7 + $0x30] sm:$0xff]
    %v570 = vld [vmem:[#allocation7 + $0x38] sm:$0xff]
    %v571 = vld [vmem:[#allocation7 + $0x40] sm:$0xff]
    %v572 = vld [vmem:[#allocation7 + $0x48] sm:$0xff]
    %v573 = vld [vmem:[#allocation7 + $0x50] sm:$0xff]
    %v574 = vld [vmem:[#allocation7 + $0x58] sm:$0xff]
    %v575 = vld [vmem:[#allocation7 + $0x60] sm:$0xff]
    %v576 = vld [vmem:[#allocation7 + $0x68] sm:$0xff]
    %v577 = vld [vmem:[#allocation7 + $0x70] sm:$0xff]
    %v578 = vld [vmem:[#allocation7 + $0x78] sm:$0xff]
    %v579 = vld [vmem:[#allocation7 + $0x80] sm:$0xff]
    %v580 = vld [vmem:[#allocation7 + $0x88] sm:$0xff]
    %v581 = vld [vmem:[#allocation7 + $0x90] sm:$0xff]
    %v582 = vld [vmem:[#allocation7 + $0x98] sm:$0xff]
    %v583 = vld [vmem:[#allocation7 + $0xa0] sm:$0xff]
    %v584 = vld [vmem:[#allocation7 + $0xa8] sm:$0xff]
    %v585 = vld [vmem:[#allocation7 + $0xb0] sm:$0xff]
    %v586 = vld [vmem:[#allocation7 + $0xb8] sm:$0xff]
    %v587 = vld [vmem:[#allocation7 + $0xc0] sm:$0xff]
    %v588 = vld [vmem:[#allocation7 + $0xc8] sm:$0xff]
    %v589 = vld [vmem:[#allocation7 + $0xd0] sm:$0xff]
    %v590 = vld [vmem:[#allocation7 + $0xd8] sm:$0xff]
    %v591 = vld [vmem:[#allocation7 + $0xe0] sm:$0xff]
    %v592 = vld [vmem:[#allocation7 + $0xe8] sm:$0xff]
    %v593 = vld [vmem:[#allocation7 + $0xf0] sm:$0xff]
    %v594 = vld [vmem:[#allocation7 + $0xf8] sm:$0xff]
    %v595 = vld [vmem:[#allocation7 + $0x100] sm:$0xff]
    %v596 = vld [vmem:[#allocation7 + $0x108] sm:$0xff]
    %v597 = vld [vmem:[#allocation7 + $0x110] sm:$0xff]
    %v598 = vld [vmem:[#allocation7 + $0x118] sm:$0xff]
    %v599 = vld [vmem:[#allocation7 + $0x120] sm:$0xff]
    %v600 = vld [vmem:[#allocation7 + $0x128] sm:$0xff]
    %v601 = vld [vmem:[#allocation7 + $0x130] sm:$0xff]
    %v602 = vld [vmem:[#allocation7 + $0x138] sm:$0xff]
    %v603 = vld [vmem:[#allocation7 + $0x140] sm:$0xff]
    %v604 = vld [vmem:[#allocation7 + $0x148] sm:$0xff]
    %v605 = vld [vmem:[#allocation7 + $0x150] sm:$0xff]
    %v606 = vld [vmem:[#allocation7 + $0x158] sm:$0xff]
    %v607 = vld [vmem:[#allocation7 + $0x160] sm:$0xff]
    %v608 = vld [vmem:[#allocation7 + $0x168] sm:$0xff]
    %v609 = vld [vmem:[#allocation7 + $0x170] sm:$0xff]
    %v610 = vld [vmem:[#allocation7 + $0x178] sm:$0xff]
    %v611 = vld [vmem:[#allocation7 + $0x180] sm:$0xff]
    %v612 = vld [vmem:[#allocation7 + $0x188] sm:$0xff]
    %v613 = vld [vmem:[#allocation7 + $0x190] sm:$0xff]
    %v614 = vld [vmem:[#allocation7 + $0x198] sm:$0xff]
    %v615 = vld [vmem:[#allocation7 + $0x1a0] sm:$0xff]
    %v616 = vld [vmem:[#allocation7 + $0x1a8] sm:$0xff]
    %v617 = vld [vmem:[#allocation7 + $0x1b0] sm:$0xff]
    %v618 = vld [vmem:[#allocation7 + $0x1b8] sm:$0xff]
    %v619 = vld [vmem:[#allocation7 + $0x1c0] sm:$0xff]
    %v620 = vld [vmem:[#allocation7 + $0x1c8] sm:$0xff]
    %v621 = vld [vmem:[#allocation7 + $0x1d0] sm:$0xff]
    %v622 = vld [vmem:[#allocation7 + $0x1d8] sm:$0xff]
    %v623 = vld [vmem:[#allocation7 + $0x1e0] sm:$0xff]
    %v624 = vld [vmem:[#allocation7 + $0x1e8] sm:$0xff]
    %v625 = vld [vmem:[#allocation7 + $0x1f0] sm:$0xff]
    %v626 = vld [vmem:[#allocation7 + $0x1f8] sm:$0xff]
    %v627 = vld [vmem:[#allocation7 + $0x200] sm:$0xff]
    %v628 = vld [vmem:[#allocation7 + $0x208] sm:$0xff]
    %v629 = vld [vmem:[#allocation7 + $0x210] sm:$0xff]
    %v630 = vld [vmem:[#allocation7 + $0x218] sm:$0xff]
    %v631 = vld [vmem:[#allocation7 + $0x220] sm:$0xff]
    %v632 = vld [vmem:[#allocation7 + $0x228] sm:$0xff]
    %v633 = vld [vmem:[#allocation7 + $0x230] sm:$0xff]
    %v634 = vld [vmem:[#allocation7 + $0x238] sm:$0xff]
    %v635 = vld [vmem:[#allocation7 + $0x240] sm:$0xff]
    %v636 = vld [vmem:[#allocation7 + $0x248] sm:$0xff]
    %v637 = vld [vmem:[#allocation7 + $0x250] sm:$0xff]
    %v638 = vld [vmem:[#allocation7 + $0x258] sm:$0xff]
    %v639 = vld [vmem:[#allocation7 + $0x260] sm:$0xff]
    %v640 = vld [vmem:[#allocation7 + $0x268] sm:$0xff]
    %v641 = vld [vmem:[#allocation7 + $0x270] sm:$0xff]
    %v642 = vld [vmem:[#allocation7 + $0x278] sm:$0xff]
    %v643 = vld [vmem:[#allocation7 + $0x280] sm:$0xff]
    %v644 = vld [vmem:[#allocation7 + $0x288] sm:$0xff]
    %v645 = vld [vmem:[#allocation7 + $0x290] sm:$0xff]
    %v646 = vld [vmem:[#allocation7 + $0x298] sm:$0xff]
    %v647 = vld [vmem:[#allocation7 + $0x2a0] sm:$0xff]
    %v648 = vld [vmem:[#allocation7 + $0x2a8] sm:$0xff]
    %v649 = vld [vmem:[#allocation7 + $0x2b0] sm:$0xff]
    %v650 = vld [vmem:[#allocation7 + $0x2b8] sm:$0xff]
    %v651 = vld [vmem:[#allocation7 + $0x2c0] sm:$0xff]
    %v652 = vld [vmem:[#allocation7 + $0x2c8] sm:$0xff]
    %v653 = vld [vmem:[#allocation7 + $0x2d0] sm:$0xff]
    %v654 = vld [vmem:[#allocation7 + $0x2d8] sm:$0xff]
    %v655 = vld [vmem:[#allocation7 + $0x2e0] sm:$0xff]
    %v656 = vld [vmem:[#allocation7 + $0x2e8] sm:$0xff]
    %v657 = vld [vmem:[#allocation7 + $0x2f0] sm:$0xff]
    %v658 = vld [vmem:[#allocation7 + $0x2f8] sm:$0xff]
    %v659 = vld [vmem:[#allocation7 + $0x300] sm:$0xff]
    %v660 = vld [vmem:[#allocation7 + $0x308] sm:$0xff]
    %v661 = vld [vmem:[#allocation7 + $0x310] sm:$0xff]
    %v662 = vld [vmem:[#allocation7 + $0x318] sm:$0xff]
    %v663 = vld [vmem:[#allocation7 + $0x320] sm:$0xff]
    %v664 = vld [vmem:[#allocation7 + $0x328] sm:$0xff]
    %v665 = vld [vmem:[#allocation7 + $0x330] sm:$0xff]
    %v666 = vld [vmem:[#allocation7 + $0x338] sm:$0xff]
    %v667 = vld [vmem:[#allocation7 + $0x340] sm:$0xff]
    %v668 = vld [vmem:[#allocation7 + $0x348] sm:$0xff]
    %v669 = vld [vmem:[#allocation7 + $0x350] sm:$0xff]
    %v670 = vld [vmem:[#allocation7 + $0x358] sm:$0xff]
    %v671 = vld [vmem:[#allocation7 + $0x360] sm:$0xff]
    %v672 = vld [vmem:[#allocation7 + $0x368] sm:$0xff]
    %v673 = vld [vmem:[#allocation7 + $0x370] sm:$0xff]
    %v674 = vld [vmem:[#allocation7 + $0x378] sm:$0xff]
    %v675 = vld [vmem:[#allocation7 + $0x380] sm:$0xff]
    %v676 = vld [vmem:[#allocation7 + $0x388] sm:$0xff]
    %v677 = vld [vmem:[#allocation7 + $0x390] sm:$0xff]
    %v678 = vld [vmem:[#allocation7 + $0x398] sm:$0xff]
    %v679 = vld [vmem:[#allocation7 + $0x3a0] sm:$0xff]
    %v680 = vld [vmem:[#allocation7 + $0x3a8] sm:$0xff]
    %v681 = vld [vmem:[#allocation7 + $0x3b0] sm:$0xff]
    %v682 = vld [vmem:[#allocation7 + $0x3b8] sm:$0xff]
    %v683 = vld [vmem:[#allocation7 + $0x3c0] sm:$0xff]
    %v684 = vld [vmem:[#allocation7 + $0x3c8] sm:$0xff]
    %v685 = vld [vmem:[#allocation7 + $0x3d0] sm:$0xff]
    %v686 = vld [vmem:[#allocation7 + $0x3d8] sm:$0xff]
    %v687 = vld [vmem:[#allocation7 + $0x3e0] sm:$0xff]
    %v688 = vld [vmem:[#allocation7 + $0x3e8] sm:$0xff]
    %v689 = vld [vmem:[#allocation7 + $0x3f0] sm:$0xff]
    %v690 = vld [vmem:[#allocation7 + $0x3f8] sm:$0xff]
    %s691 = scalar_lea.vmem [#allocation11], 1
    %v692 = vld [vmem:[%s691] ss:$4 sm:$0xf]
    %v694 = vlaneseq
    %v695 = vshrl.u32 %v694, 7
    %v696 = vsub.s32 0, %v695
    %v697 = vrot.slane %v692, %v696
    %v698 = vlaneseq
    %v699 = vshrl.u32 %v698, 7
    %v700 = vsub.s32 1, %v699
    %v701 = vrot.slane %v692, %v700
    %v702 = vlaneseq
    %v703 = vshrl.u32 %v702, 7
    %v704 = vsub.s32 2, %v703
    %v705 = vrot.slane %v692, %v704
    %v706 = vlaneseq
    %v707 = vshrl.u32 %v706, 7
    %v708 = vsub.s32 3, %v707
    %v709 = vrot.slane %v692, %v708
    %v842 = vunpack.c.l.b16 %v563
    %v843 = vunpack.c.h.b16 %v563
    %v844 = vunpack.c.l.b16 %v564
    %v845 = vunpack.c.h.b16 %v564
    %v846 = vunpack.c.l.b16 %v565
    %v847 = vunpack.c.h.b16 %v565
    %v848 = vunpack.c.l.b16 %v566
    %v849 = vunpack.c.h.b16 %v566
    %v850 = vunpack.c.l.b16 %v567
    %v851 = vunpack.c.h.b16 %v567
    %v852 = vunpack.c.l.b16 %v568
    %v853 = vunpack.c.h.b16 %v568
    %v854 = vunpack.c.l.b16 %v569
    %v855 = vunpack.c.h.b16 %v569
    %v856 = vunpack.c.l.b16 %v570
    %v857 = vunpack.c.h.b16 %v570
    %v858 = vunpack.c.l.b16 %v571
    %v859 = vunpack.c.h.b16 %v571
    %v860 = vunpack.c.l.b16 %v572
    %v861 = vunpack.c.h.b16 %v572
    %v862 = vunpack.c.l.b16 %v573
    %v863 = vunpack.c.h.b16 %v573
    %v864 = vunpack.c.l.b16 %v574
    %v865 = vunpack.c.h.b16 %v574
    %v866 = vunpack.c.l.b16 %v575
    %v867 = vunpack.c.h.b16 %v575
    %v868 = vunpack.c.l.b16 %v576
    %v869 = vunpack.c.h.b16 %v576
    %v870 = vunpack.c.l.b16 %v577
    %v871 = vunpack.c.h.b16 %v577
    %v872 = vunpack.c.l.b16 %v578
    %v873 = vunpack.c.h.b16 %v578
    %v874 = vunpack.c.l.b16 %v579
    %v875 = vunpack.c.h.b16 %v579
    %v876 = vunpack.c.l.b16 %v580
    %v877 = vunpack.c.h.b16 %v580
    %v878 = vunpack.c.l.b16 %v581
    %v879 = vunpack.c.h.b16 %v581
    %v880 = vunpack.c.l.b16 %v582
    %v881 = vunpack.c.h.b16 %v582
    %v882 = vunpack.c.l.b16 %v583
    %v883 = vunpack.c.h.b16 %v583
    %v884 = vunpack.c.l.b16 %v584
    %v885 = vunpack.c.h.b16 %v584
    %v886 = vunpack.c.l.b16 %v585
    %v887 = vunpack.c.h.b16 %v585
    %v888 = vunpack.c.l.b16 %v586
    %v889 = vunpack.c.h.b16 %v586
    %v890 = vunpack.c.l.b16 %v587
    %v891 = vunpack.c.h.b16 %v587
    %v892 = vunpack.c.l.b16 %v588
    %v893 = vunpack.c.h.b16 %v588
    %v894 = vunpack.c.l.b16 %v589
    %v895 = vunpack.c.h.b16 %v589
    %v896 = vunpack.c.l.b16 %v590
    %v897 = vunpack.c.h.b16 %v590
    %v898 = vunpack.c.l.b16 %v591
    %v899 = vunpack.c.h.b16 %v591
    %v900 = vunpack.c.l.b16 %v592
    %v901 = vunpack.c.h.b16 %v592
    %v902 = vunpack.c.l.b16 %v593
    %v903 = vunpack.c.h.b16 %v593
    %v904 = vunpack.c.l.b16 %v594
    %v905 = vunpack.c.h.b16 %v594
    %v906 = vunpack.c.l.b16 %v595
    %v907 = vunpack.c.h.b16 %v595
    %v908 = vunpack.c.l.b16 %v596
    %v909 = vunpack.c.h.b16 %v596
    %v910 = vunpack.c.l.b16 %v597
    %v911 = vunpack.c.h.b16 %v597
    %v912 = vunpack.c.l.b16 %v598
    %v913 = vunpack.c.h.b16 %v598
    %v914 = vunpack.c.l.b16 %v599
    %v915 = vunpack.c.h.b16 %v599
    %v916 = vunpack.c.l.b16 %v600
    %v917 = vunpack.c.h.b16 %v600
    %v918 = vunpack.c.l.b16 %v601
    %v919 = vunpack.c.h.b16 %v601
    %v920 = vunpack.c.l.b16 %v602
    %v921 = vunpack.c.h.b16 %v602
    %v922 = vunpack.c.l.b16 %v603
    %v923 = vunpack.c.h.b16 %v603
    %v924 = vunpack.c.l.b16 %v604
    %v925 = vunpack.c.h.b16 %v604
    %v926 = vunpack.c.l.b16 %v605
    %v927 = vunpack.c.h.b16 %v605
    %v928 = vunpack.c.l.b16 %v606
    %v929 = vunpack.c.h.b16 %v606
    %v930 = vunpack.c.l.b16 %v607
    %v931 = vunpack.c.h.b16 %v607
    %v932 = vunpack.c.l.b16 %v608
    %v933 = vunpack.c.h.b16 %v608
    %v934 = vunpack.c.l.b16 %v609
    %v935 = vunpack.c.h.b16 %v609
    %v936 = vunpack.c.l.b16 %v610
    %v937 = vunpack.c.h.b16 %v610
    %v938 = vunpack.c.l.b16 %v611
    %v939 = vunpack.c.h.b16 %v611
    %v940 = vunpack.c.l.b16 %v612
    %v941 = vunpack.c.h.b16 %v612
    %v942 = vunpack.c.l.b16 %v613
    %v943 = vunpack.c.h.b16 %v613
    %v944 = vunpack.c.l.b16 %v614
    %v945 = vunpack.c.h.b16 %v614
    %v946 = vunpack.c.l.b16 %v615
    %v947 = vunpack.c.h.b16 %v615
    %v948 = vunpack.c.l.b16 %v616
    %v949 = vunpack.c.h.b16 %v616
    %v950 = vunpack.c.l.b16 %v617
    %v951 = vunpack.c.h.b16 %v617
    %v952 = vunpack.c.l.b16 %v618
    %v953 = vunpack.c.h.b16 %v618
    %v954 = vunpack.c.l.b16 %v619
    %v955 = vunpack.c.h.b16 %v619
    %v956 = vunpack.c.l.b16 %v620
    %v957 = vunpack.c.h.b16 %v620
    %v958 = vunpack.c.l.b16 %v621
    %v959 = vunpack.c.h.b16 %v621
    %v960 = vunpack.c.l.b16 %v622
    %v961 = vunpack.c.h.b16 %v622
    %v962 = vunpack.c.l.b16 %v623
    %v963 = vunpack.c.h.b16 %v623
    %v964 = vunpack.c.l.b16 %v624
    %v965 = vunpack.c.h.b16 %v624
    %v966 = vunpack.c.l.b16 %v625
    %v967 = vunpack.c.h.b16 %v625
    %v968 = vunpack.c.l.b16 %v626
    %v969 = vunpack.c.h.b16 %v626
    %v970 = vunpack.c.l.b16 %v627
    %v971 = vunpack.c.h.b16 %v627
    %v972 = vunpack.c.l.b16 %v628
    %v973 = vunpack.c.h.b16 %v628
    %v974 = vunpack.c.l.b16 %v629
    %v975 = vunpack.c.h.b16 %v629
    %v976 = vunpack.c.l.b16 %v630
    %v977 = vunpack.c.h.b16 %v630
    %v978 = vunpack.c.l.b16 %v631
    %v979 = vunpack.c.h.b16 %v631
    %v980 = vunpack.c.l.b16 %v632
    %v981 = vunpack.c.h.b16 %v632
    %v982 = vunpack.c.l.b16 %v633
    %v983 = vunpack.c.h.b16 %v633
    %v984 = vunpack.c.l.b16 %v634
    %v985 = vunpack.c.h.b16 %v634
    %v986 = vunpack.c.l.b16 %v635
    %v987 = vunpack.c.h.b16 %v635
    %v988 = vunpack.c.l.b16 %v636
    %v989 = vunpack.c.h.b16 %v636
    %v990 = vunpack.c.l.b16 %v637
    %v991 = vunpack.c.h.b16 %v637
    %v992 = vunpack.c.l.b16 %v638
    %v993 = vunpack.c.h.b16 %v638
    %v994 = vunpack.c.l.b16 %v639
    %v995 = vunpack.c.h.b16 %v639
    %v996 = vunpack.c.l.b16 %v640
    %v997 = vunpack.c.h.b16 %v640
    %v998 = vunpack.c.l.b16 %v641
    %v999 = vunpack.c.h.b16 %v641
    %v1000 = vunpack.c.l.b16 %v642
    %v1001 = vunpack.c.h.b16 %v642
    %v1002 = vunpack.c.l.b16 %v643
    %v1003 = vunpack.c.h.b16 %v643
    %v1004 = vunpack.c.l.b16 %v644
    %v1005 = vunpack.c.h.b16 %v644
    %v1006 = vunpack.c.l.b16 %v645
    %v1007 = vunpack.c.h.b16 %v645
    %v1008 = vunpack.c.l.b16 %v646
    %v1009 = vunpack.c.h.b16 %v646
    %v1010 = vunpack.c.l.b16 %v647
    %v1011 = vunpack.c.h.b16 %v647
    %v1012 = vunpack.c.l.b16 %v648
    %v1013 = vunpack.c.h.b16 %v648
    %v1014 = vunpack.c.l.b16 %v649
    %v1015 = vunpack.c.h.b16 %v649
    %v1016 = vunpack.c.l.b16 %v650
    %v1017 = vunpack.c.h.b16 %v650
    %v1018 = vunpack.c.l.b16 %v651
    %v1019 = vunpack.c.h.b16 %v651
    %v1020 = vunpack.c.l.b16 %v652
    %v1021 = vunpack.c.h.b16 %v652
    %v1022 = vunpack.c.l.b16 %v653
    %v1023 = vunpack.c.h.b16 %v653
    %v1024 = vunpack.c.l.b16 %v654
    %v1025 = vunpack.c.h.b16 %v654
    %v1026 = vunpack.c.l.b16 %v655
    %v1027 = vunpack.c.h.b16 %v655
    %v1028 = vunpack.c.l.b16 %v656
    %v1029 = vunpack.c.h.b16 %v656
    %v1030 = vunpack.c.l.b16 %v657
    %v1031 = vunpack.c.h.b16 %v657
    %v1032 = vunpack.c.l.b16 %v658
    %v1033 = vunpack.c.h.b16 %v658
    %v1034 = vunpack.c.l.b16 %v659
    %v1035 = vunpack.c.h.b16 %v659
    %v1036 = vunpack.c.l.b16 %v660
    %v1037 = vunpack.c.h.b16 %v660
    %v1038 = vunpack.c.l.b16 %v661
    %v1039 = vunpack.c.h.b16 %v661
    %v1040 = vunpack.c.l.b16 %v662
    %v1041 = vunpack.c.h.b16 %v662
    %v1042 = vunpack.c.l.b16 %v663
    %v1043 = vunpack.c.h.b16 %v663
    %v1044 = vunpack.c.l.b16 %v664
    %v1045 = vunpack.c.h.b16 %v664
    %v1046 = vunpack.c.l.b16 %v665
    %v1047 = vunpack.c.h.b16 %v665
    %v1048 = vunpack.c.l.b16 %v666
    %v1049 = vunpack.c.h.b16 %v666
    %v1050 = vunpack.c.l.b16 %v667
    %v1051 = vunpack.c.h.b16 %v667
    %v1052 = vunpack.c.l.b16 %v668
    %v1053 = vunpack.c.h.b16 %v668
    %v1054 = vunpack.c.l.b16 %v669
    %v1055 = vunpack.c.h.b16 %v669
    %v1056 = vunpack.c.l.b16 %v670
    %v1057 = vunpack.c.h.b16 %v670
    %v1058 = vunpack.c.l.b16 %v671
    %v1059 = vunpack.c.h.b16 %v671
    %v1060 = vunpack.c.l.b16 %v672
    %v1061 = vunpack.c.h.b16 %v672
    %v1062 = vunpack.c.l.b16 %v673
    %v1063 = vunpack.c.h.b16 %v673
    %v1064 = vunpack.c.l.b16 %v674
    %v1065 = vunpack.c.h.b16 %v674
    %v1066 = vunpack.c.l.b16 %v675
    %v1067 = vunpack.c.h.b16 %v675
    %v1068 = vunpack.c.l.b16 %v676
    %v1069 = vunpack.c.h.b16 %v676
    %v1070 = vunpack.c.l.b16 %v677
    %v1071 = vunpack.c.h.b16 %v677
    %v1072 = vunpack.c.l.b16 %v678
    %v1073 = vunpack.c.h.b16 %v678
    %v1074 = vunpack.c.l.b16 %v679
    %v1075 = vunpack.c.h.b16 %v679
    %v1076 = vunpack.c.l.b16 %v680
    %v1077 = vunpack.c.h.b16 %v680
    %v1078 = vunpack.c.l.b16 %v681
    %v1079 = vunpack.c.h.b16 %v681
    %v1080 = vunpack.c.l.b16 %v682
    %v1081 = vunpack.c.h.b16 %v682
    %v1082 = vunpack.c.l.b16 %v683
    %v1083 = vunpack.c.h.b16 %v683
    %v1084 = vunpack.c.l.b16 %v684
    %v1085 = vunpack.c.h.b16 %v684
    %v1086 = vunpack.c.l.b16 %v685
    %v1087 = vunpack.c.h.b16 %v685
    %v1088 = vunpack.c.l.b16 %v686
    %v1089 = vunpack.c.h.b16 %v686
    %v1090 = vunpack.c.l.b16 %v687
    %v1091 = vunpack.c.h.b16 %v687
    %v1092 = vunpack.c.l.b16 %v688
    %v1093 = vunpack.c.h.b16 %v688
    %v1094 = vunpack.c.l.b16 %v689
    %v1095 = vunpack.c.h.b16 %v689
    %v1096 = vunpack.c.l.b16 %v690
    %v1097 = vunpack.c.h.b16 %v690
    %v1098 = vpack.c.b16 %v846, %v842
    %v1099 = vpack.c.b16 %v847, %v843
    %v1100 = vpack.c.b16 %v848, %v844
    %v1101 = vpack.c.b16 %v849, %v845
    %v1102 = vpack.c.b16 %v854, %v850
    %v1103 = vpack.c.b16 %v855, %v851
    %v1104 = vpack.c.b16 %v856, %v852
    %v1105 = vpack.c.b16 %v857, %v853
    %v1106 = vpack.c.b16 %v862, %v858
    %v1107 = vpack.c.b16 %v863, %v859
    %v1108 = vpack.c.b16 %v864, %v860
    %v1109 = vpack.c.b16 %v865, %v861
    %v1110 = vpack.c.b16 %v870, %v866
    %v1111 = vpack.c.b16 %v871, %v867
    %v1112 = vpack.c.b16 %v872, %v868
    %v1113 = vpack.c.b16 %v873, %v869
    %v1114 = vpack.c.b16 %v878, %v874
    %v1115 = vpack.c.b16 %v879, %v875
    %v1116 = vpack.c.b16 %v880, %v876
    %v1117 = vpack.c.b16 %v881, %v877
    %v1118 = vpack.c.b16 %v886, %v882
    %v1119 = vpack.c.b16 %v887, %v883
    %v1120 = vpack.c.b16 %v888, %v884
    %v1121 = vpack.c.b16 %v889, %v885
    %v1122 = vpack.c.b16 %v894, %v890
    %v1123 = vpack.c.b16 %v895, %v891
    %v1124 = vpack.c.b16 %v896, %v892
    %v1125 = vpack.c.b16 %v897, %v893
    %v1126 = vpack.c.b16 %v902, %v898
    %v1127 = vpack.c.b16 %v903, %v899
    %v1128 = vpack.c.b16 %v904, %v900
    %v1129 = vpack.c.b16 %v905, %v901
    %v1130 = vpack.c.b16 %v910, %v906
    %v1131 = vpack.c.b16 %v911, %v907
    %v1132 = vpack.c.b16 %v912, %v908
    %v1133 = vpack.c.b16 %v913, %v909
    %v1134 = vpack.c.b16 %v918, %v914
    %v1135 = vpack.c.b16 %v919, %v915
    %v1136 = vpack.c.b16 %v920, %v916
    %v1137 = vpack.c.b16 %v921, %v917
    %v1138 = vpack.c.b16 %v926, %v922
    %v1139 = vpack.c.b16 %v927, %v923
    %v1140 = vpack.c.b16 %v928, %v924
    %v1141 = vpack.c.b16 %v929, %v925
    %v1142 = vpack.c.b16 %v934, %v930
    %v1143 = vpack.c.b16 %v935, %v931
    %v1144 = vpack.c.b16 %v936, %v932
    %v1145 = vpack.c.b16 %v937, %v933
    %v1146 = vpack.c.b16 %v942, %v938
    %v1147 = vpack.c.b16 %v943, %v939
    %v1148 = vpack.c.b16 %v944, %v940
    %v1149 = vpack.c.b16 %v945, %v941
    %v1150 = vpack.c.b16 %v950, %v946
    %v1151 = vpack.c.b16 %v951, %v947
    %v1152 = vpack.c.b16 %v952, %v948
    %v1153 = vpack.c.b16 %v953, %v949
    %v1154 = vpack.c.b16 %v958, %v954
    %v1155 = vpack.c.b16 %v959, %v955
    %v1156 = vpack.c.b16 %v960, %v956
    %v1157 = vpack.c.b16 %v961, %v957
    %v1158 = vpack.c.b16 %v966, %v962
    %v1159 = vpack.c.b16 %v967, %v963
    %v1160 = vpack.c.b16 %v968, %v964
    %v1161 = vpack.c.b16 %v969, %v965
    %v1162 = vpack.c.b16 %v974, %v970
    %v1163 = vpack.c.b16 %v975, %v971
    %v1164 = vpack.c.b16 %v976, %v972
    %v1165 = vpack.c.b16 %v977, %v973
    %v1166 = vpack.c.b16 %v982, %v978
    %v1167 = vpack.c.b16 %v983, %v979
    %v1168 = vpack.c.b16 %v984, %v980
    %v1169 = vpack.c.b16 %v985, %v981
    %v1170 = vpack.c.b16 %v990, %v986
    %v1171 = vpack.c.b16 %v991, %v987
    %v1172 = vpack.c.b16 %v992, %v988
    %v1173 = vpack.c.b16 %v993, %v989
    %v1174 = vpack.c.b16 %v998, %v994
    %v1175 = vpack.c.b16 %v999, %v995
    %v1176 = vpack.c.b16 %v1000, %v996
    %v1177 = vpack.c.b16 %v1001, %v997
    %v1178 = vpack.c.b16 %v1006, %v1002
    %v1179 = vpack.c.b16 %v1007, %v1003
    %v1180 = vpack.c.b16 %v1008, %v1004
    %v1181 = vpack.c.b16 %v1009, %v1005
    %v1182 = vpack.c.b16 %v1014, %v1010
    %v1183 = vpack.c.b16 %v1015, %v1011
    %v1184 = vpack.c.b16 %v1016, %v1012
    %v1185 = vpack.c.b16 %v1017, %v1013
    %v1186 = vpack.c.b16 %v1022, %v1018
    %v1187 = vpack.c.b16 %v1023, %v1019
    %v1188 = vpack.c.b16 %v1024, %v1020
    %v1189 = vpack.c.b16 %v1025, %v1021
    %v1190 = vpack.c.b16 %v1030, %v1026
    %v1191 = vpack.c.b16 %v1031, %v1027
    %v1192 = vpack.c.b16 %v1032, %v1028
    %v1193 = vpack.c.b16 %v1033, %v1029
    %v1194 = vpack.c.b16 %v1038, %v1034
    %v1195 = vpack.c.b16 %v1039, %v1035
    %v1196 = vpack.c.b16 %v1040, %v1036
    %v1197 = vpack.c.b16 %v1041, %v1037
    %v1198 = vpack.c.b16 %v1046, %v1042
    %v1199 = vpack.c.b16 %v1047, %v1043
    %v1200 = vpack.c.b16 %v1048, %v1044
    %v1201 = vpack.c.b16 %v1049, %v1045
    %v1202 = vpack.c.b16 %v1054, %v1050
    %v1203 = vpack.c.b16 %v1055, %v1051
    %v1204 = vpack.c.b16 %v1056, %v1052
    %v1205 = vpack.c.b16 %v1057, %v1053
    %v1206 = vpack.c.b16 %v1062, %v1058
    %v1207 = vpack.c.b16 %v1063, %v1059
    %v1208 = vpack.c.b16 %v1064, %v1060
    %v1209 = vpack.c.b16 %v1065, %v1061
    %v1210 = vpack.c.b16 %v1070, %v1066
    %v1211 = vpack.c.b16 %v1071, %v1067
    %v1212 = vpack.c.b16 %v1072, %v1068
    %v1213 = vpack.c.b16 %v1073, %v1069
    %v1214 = vpack.c.b16 %v1078, %v1074
    %v1215 = vpack.c.b16 %v1079, %v1075
    %v1216 = vpack.c.b16 %v1080, %v1076
    %v1217 = vpack.c.b16 %v1081, %v1077
    %v1218 = vpack.c.b16 %v1086, %v1082
    %v1219 = vpack.c.b16 %v1087, %v1083
    %v1220 = vpack.c.b16 %v1088, %v1084
    %v1221 = vpack.c.b16 %v1089, %v1085
    %v1222 = vpack.c.b16 %v1094, %v1090
    %v1223 = vpack.c.b16 %v1095, %v1091
    %v1224 = vpack.c.b16 %v1096, %v1092
    %v1225 = vpack.c.b16 %v1097, %v1093
    %1354 = vmatprep.subr.bf16.mxu0 %v1099
    %1355 = vmatpush1.bf16.msra.mxu0 %v1098
    %1356 = vmatprep.subr.bf16.mxu0 %v1103
    %1357 = vmatpush1.bf16.msra.mxu0 %v1102
    %1358 = vmatprep.subr.bf16.mxu0 %v1107
    %1359 = vmatpush1.bf16.msra.mxu0 %v1106
    %1360 = vmatprep.subr.bf16.mxu0 %v1111
    %1361 = vmatpush1.bf16.msra.mxu0 %v1110
    %1362 = vmatprep.subr.bf16.mxu0 %v1115
    %1363 = vmatpush1.bf16.msra.mxu0 %v1114
    %1364 = vmatprep.subr.bf16.mxu0 %v1119
    %1365 = vmatpush1.bf16.msra.mxu0 %v1118
    %1366 = vmatprep.subr.bf16.mxu0 %v1123
    %1367 = vmatpush1.bf16.msra.mxu0 %v1122
    %1368 = vmatprep.subr.bf16.mxu0 %v1127
    %1369 = vmatpush1.bf16.msra.mxu0 %v1126
    %1370 = vmatprep.subr.bf16.mxu0 %v1131
    %1371 = vmatpush1.bf16.msra.mxu0 %v1130
    %1372 = vmatprep.subr.bf16.mxu0 %v1135
    %1373 = vmatpush1.bf16.msra.mxu0 %v1134
    %1374 = vmatprep.subr.bf16.mxu0 %v1139
    %1375 = vmatpush1.bf16.msra.mxu0 %v1138
    %1376 = vmatprep.subr.bf16.mxu0 %v1143
    %1377 = vmatpush1.bf16.msra.mxu0 %v1142
    %1378 = vmatprep.subr.bf16.mxu0 %v1147
    %1379 = vmatpush1.bf16.msra.mxu0 %v1146
    %1380 = vmatprep.subr.bf16.mxu0 %v1151
    %1381 = vmatpush1.bf16.msra.mxu0 %v1150
    %1382 = vmatprep.subr.bf16.mxu0 %v1155
    %1383 = vmatpush1.bf16.msra.mxu0 %v1154
    %1384 = vmatprep.subr.bf16.mxu0 %v1159
    %1385 = vmatpush1.bf16.msra.mxu0 %v1158
    %1386 = vmatprep.mubr.bf16.mxu0 %v560
    %1387 = vmatmul.mubr.bf16.gmra.mrb[0].mxu0 %v559
    %v1388 = vpop.f32.mrb[0].mxu0
    %v1389 = vadd.f32 %v697, %v1388
    %v1390 = vpop.f32.mrb[0].mxu0
    %v1391 = vadd.f32 %v701, %v1390
    %v1392 = vpop.f32.mrb[0].mxu0
    %v1393 = vpop.f32.mrb[0].mxu0
    %1394 = vdwg.mxu0
    %1395 = vmatprep.subr.bf16.mxu0 %v1163
    %1396 = vmatpush1.bf16.msra.mxu0 %v1162
    %1397 = vmatprep.subr.bf16.mxu0 %v1167
    %1398 = vmatpush1.bf16.msra.mxu0 %v1166
    %1399 = vmatprep.subr.bf16.mxu0 %v1171
    %1400 = vmatpush1.bf16.msra.mxu0 %v1170
    %1401 = vmatprep.subr.bf16.mxu0 %v1175
    %1402 = vmatpush1.bf16.msra.mxu0 %v1174
    %1403 = vmatprep.subr.bf16.mxu0 %v1179
    %1404 = vmatpush1.bf16.msra.mxu0 %v1178
    %1405 = vmatprep.subr.bf16.mxu0 %v1183
    %1406 = vmatpush1.bf16.msra.mxu0 %v1182
    %1407 = vmatprep.subr.bf16.mxu0 %v1187
    %1408 = vmatpush1.bf16.msra.mxu0 %v1186
    %1409 = vmatprep.subr.bf16.mxu0 %v1191
    %1410 = vmatpush1.bf16.msra.mxu0 %v1190
    %1411 = vmatprep.subr.bf16.mxu0 %v1195
    %1412 = vmatpush1.bf16.msra.mxu0 %v1194
    %1413 = vmatprep.subr.bf16.mxu0 %v1199
    %1414 = vmatpush1.bf16.msra.mxu0 %v1198
    %1415 = vmatprep.subr.bf16.mxu0 %v1203
    %1416 = vmatpush1.bf16.msra.mxu0 %v1202
    %1417 = vmatprep.subr.bf16.mxu0 %v1207
    %1418 = vmatpush1.bf16.msra.mxu0 %v1206
    %1419 = vmatprep.subr.bf16.mxu0 %v1211
    %1420 = vmatpush1.bf16.msra.mxu0 %v1210
    %1421 = vmatprep.subr.bf16.mxu0 %v1215
    %1422 = vmatpush1.bf16.msra.mxu0 %v1214
    %1423 = vmatprep.subr.bf16.mxu0 %v1219
    %1424 = vmatpush1.bf16.msra.mxu0 %v1218
    %1425 = vmatprep.subr.bf16.mxu0 %v1223
    %1426 = vmatpush1.bf16.msra.mxu0 %v1222
    %1427 = vmatprep.mubr.bf16.mxu0 %v562
    %1428 = vmatmul.mubr.bf16.gmra.mrb[0].mxu0 %v561
    %v1429 = vpop.f32.mrb[0].mxu0
    %v1430 = vadd.f32 %v1389, %v1429
    %v1431 = vpop.f32.mrb[0].mxu0
    %v1432 = vadd.f32 %v1391, %v1431
    %v1433 = vpop.f32.mrb[0].mxu0
    %v1434 = vpop.f32.mrb[0].mxu0
    %1435 = vdwg.mxu0
    %1436 = vmatprep.subr.bf16.mxu0 %v1101
    %1437 = vmatpush1.bf16.msra.mxu0 %v1100
    %1438 = vmatprep.subr.bf16.mxu0 %v1105
    %1439 = vmatpush1.bf16.msra.mxu0 %v1104
    %1440 = vmatprep.subr.bf16.mxu0 %v1109
    %1441 = vmatpush1.bf16.msra.mxu0 %v1108
    %1442 = vmatprep.subr.bf16.mxu0 %v1113
    %1443 = vmatpush1.bf16.msra.mxu0 %v1112
    %1444 = vmatprep.subr.bf16.mxu0 %v1117
    %1445 = vmatpush1.bf16.msra.mxu0 %v1116
    %1446 = vmatprep.subr.bf16.mxu0 %v1121
    %1447 = vmatpush1.bf16.msra.mxu0 %v1120
    %1448 = vmatprep.subr.bf16.mxu0 %v1125
    %1449 = vmatpush1.bf16.msra.mxu0 %v1124
    %1450 = vmatprep.subr.bf16.mxu0 %v1129
    %1451 = vmatpush1.bf16.msra.mxu0 %v1128
    %1452 = vmatprep.subr.bf16.mxu0 %v1133
    %1453 = vmatpush1.bf16.msra.mxu0 %v1132
    %1454 = vmatprep.subr.bf16.mxu0 %v1137
    %1455 = vmatpush1.bf16.msra.mxu0 %v1136
    %1456 = vmatprep.subr.bf16.mxu0 %v1141
    %1457 = vmatpush1.bf16.msra.mxu0 %v1140
    %1458 = vmatprep.subr.bf16.mxu0 %v1145
    %1459 = vmatpush1.bf16.msra.mxu0 %v1144
    %1460 = vmatprep.subr.bf16.mxu0 %v1149
    %1461 = vmatpush1.bf16.msra.mxu0 %v1148
    %1462 = vmatprep.subr.bf16.mxu0 %v1153
    %1463 = vmatpush1.bf16.msra.mxu0 %v1152
    %1464 = vmatprep.subr.bf16.mxu0 %v1157
    %1465 = vmatpush1.bf16.msra.mxu0 %v1156
    %1466 = vmatprep.subr.bf16.mxu0 %v1161
    %1467 = vmatpush1.bf16.msra.mxu0 %v1160
    %1468 = vmatprep.mubr.bf16.mxu0 %v560
    %1469 = vmatmul.mubr.bf16.gmra.mrb[0].mxu0 %v559
    %v1470 = vpop.f32.mrb[0].mxu0
    %v1471 = vadd.f32 %v705, %v1470
    %v1472 = vpop.f32.mrb[0].mxu0
    %v1473 = vadd.f32 %v709, %v1472
    %v1474 = vpop.f32.mrb[0].mxu0
    %v1475 = vpop.f32.mrb[0].mxu0
    %1476 = vdwg.mxu0
    %1477 = vmatprep.subr.bf16.mxu0 %v1165
    %1478 = vmatpush1.bf16.msra.mxu0 %v1164
    %1479 = vmatprep.subr.bf16.mxu0 %v1169
    %1480 = vmatpush1.bf16.msra.mxu0 %v1168
    %1481 = vmatprep.subr.bf16.mxu0 %v1173
    %1482 = vmatpush1.bf16.msra.mxu0 %v1172
    %1483 = vmatprep.subr.bf16.mxu0 %v1177
    %1484 = vmatpush1.bf16.msra.mxu0 %v1176
    %1485 = vmatprep.subr.bf16.mxu0 %v1181
    %1486 = vmatpush1.bf16.msra.mxu0 %v1180
    %1487 = vmatprep.subr.bf16.mxu0 %v1185
    %1488 = vmatpush1.bf16.msra.mxu0 %v1184
    %1489 = vmatprep.subr.bf16.mxu0 %v1189
    %1490 = vmatpush1.bf16.msra.mxu0 %v1188
    %1491 = vmatprep.subr.bf16.mxu0 %v1193
    %1492 = vmatpush1.bf16.msra.mxu0 %v1192
    %1493 = vmatprep.subr.bf16.mxu0 %v1197
    %1494 = vmatpush1.bf16.msra.mxu0 %v1196
    %1495 = vmatprep.subr.bf16.mxu0 %v1201
    %1496 = vmatpush1.bf16.msra.mxu0 %v1200
    %1497 = vmatprep.subr.bf16.mxu0 %v1205
    %1498 = vmatpush1.bf16.msra.mxu0 %v1204
    %1499 = vmatprep.subr.bf16.mxu0 %v1209
    %1500 = vmatpush1.bf16.msra.mxu0 %v1208
    %1501 = vmatprep.subr.bf16.mxu0 %v1213
    %1502 = vmatpush1.bf16.msra.mxu0 %v1212
    %1503 = vmatprep.subr.bf16.mxu0 %v1217
    %1504 = vmatpush1.bf16.msra.mxu0 %v1216
    %1505 = vmatprep.subr.bf16.mxu0 %v1221
    %1506 = vmatpush1.bf16.msra.mxu0 %v1220
    %1507 = vmatprep.subr.bf16.mxu0 %v1225
    %1508 = vmatpush1.bf16.msra.mxu0 %v1224
    %1509 = vmatprep.mubr.bf16.mxu0 %v562
    %1510 = vmatmul.mubr.bf16.gmra.mrb[0].mxu0 %v561
    %v1511 = vpop.f32.mrb[0].mxu0
    %v1512 = vadd.f32 %v1471, %v1511
    %v1513 = vpop.f32.mrb[0].mxu0
    %v1514 = vadd.f32 %v1473, %v1513
    %v1515 = vpop.f32.mrb[0].mxu0
    %v1516 = vpop.f32.mrb[0].mxu0
    %1517 = vdwg.mxu0
    %v1518 = vmax.f32 %v1430, 0.0
    %v1519 = vmax.f32 %v1432, 0.0
    %v1520 = vmax.f32 %v1512, 0.0
    %v1521 = vmax.f32 %v1514, 0.0
    %v1522 = vpack.c.bf16 %v1518, %v1518
    %v1523 = vpack.c.bf16 %v1519, %v1519
    %v1524 = vpack.c.bf16 %v1520, %v1520
    %v1525 = vpack.c.bf16 %v1521, %v1521
    %v1526 = vld [vmem:[#allocation8] sm:$0xff]
    %v1527 = vld [vmem:[#allocation8 + $0x8] sm:$0xff]
    %v1528 = vld [vmem:[#allocation8 + $0x10] sm:$0xff]
    %v1529 = vld [vmem:[#allocation8 + $0x18] sm:$0xff]
    %v1530 = vld [vmem:[#allocation8 + $0x20] sm:$0xff]
    %v1531 = vld [vmem:[#allocation8 + $0x28] sm:$0xff]
    %v1532 = vld [vmem:[#allocation8 + $0x30] sm:$0xff]
    %v1533 = vld [vmem:[#allocation8 + $0x38] sm:$0xff]
    %v1534 = vld [vmem:[#allocation8 + $0x40] sm:$0xff]
    %v1535 = vld [vmem:[#allocation8 + $0x48] sm:$0xff]
    %v1536 = vld [vmem:[#allocation8 + $0x50] sm:$0xff]
    %v1537 = vld [vmem:[#allocation8 + $0x58] sm:$0xff]
    %v1538 = vld [vmem:[#allocation8 + $0x60] sm:$0xff]
    %v1539 = vld [vmem:[#allocation8 + $0x68] sm:$0xff]
    %v1540 = vld [vmem:[#allocation8 + $0x70] sm:$0xff]
    %v1541 = vld [vmem:[#allocation8 + $0x78] sm:$0xff]
    %v1542 = vld [vmem:[#allocation8 + $0x80] sm:$0xff]
    %v1543 = vld [vmem:[#allocation8 + $0x88] sm:$0xff]
    %v1544 = vld [vmem:[#allocation8 + $0x90] sm:$0xff]
    %v1545 = vld [vmem:[#allocation8 + $0x98] sm:$0xff]
    %v1546 = vld [vmem:[#allocation8 + $0xa0] sm:$0xff]
    %v1547 = vld [vmem:[#allocation8 + $0xa8] sm:$0xff]
    %v1548 = vld [vmem:[#allocation8 + $0xb0] sm:$0xff]
    %v1549 = vld [vmem:[#allocation8 + $0xb8] sm:$0xff]
    %v1550 = vld [vmem:[#allocation8 + $0xc0] sm:$0xff]
    %v1551 = vld [vmem:[#allocation8 + $0xc8] sm:$0xff]
    %v1552 = vld [vmem:[#allocation8 + $0xd0] sm:$0xff]
    %v1553 = vld [vmem:[#allocation8 + $0xd8] sm:$0xff]
    %v1554 = vld [vmem:[#allocation8 + $0xe0] sm:$0xff]
    %v1555 = vld [vmem:[#allocation8 + $0xe8] sm:$0xff]
    %v1556 = vld [vmem:[#allocation8 + $0xf0] sm:$0xff]
    %v1557 = vld [vmem:[#allocation8 + $0xf8] sm:$0xff]
    %v1558 = vld [vmem:[#allocation8 + $0x100] sm:$0xff]
    %v1559 = vld [vmem:[#allocation8 + $0x108] sm:$0xff]
    %v1560 = vld [vmem:[#allocation8 + $0x110] sm:$0xff]
    %v1561 = vld [vmem:[#allocation8 + $0x118] sm:$0xff]
    %v1562 = vld [vmem:[#allocation8 + $0x120] sm:$0xff]
    %v1563 = vld [vmem:[#allocation8 + $0x128] sm:$0xff]
    %v1564 = vld [vmem:[#allocation8 + $0x130] sm:$0xff]
    %v1565 = vld [vmem:[#allocation8 + $0x138] sm:$0xff]
    %v1566 = vld [vmem:[#allocation8 + $0x140] sm:$0xff]
    %v1567 = vld [vmem:[#allocation8 + $0x148] sm:$0xff]
    %v1568 = vld [vmem:[#allocation8 + $0x150] sm:$0xff]
    %v1569 = vld [vmem:[#allocation8 + $0x158] sm:$0xff]
    %v1570 = vld [vmem:[#allocation8 + $0x160] sm:$0xff]
    %v1571 = vld [vmem:[#allocation8 + $0x168] sm:$0xff]
    %v1572 = vld [vmem:[#allocation8 + $0x170] sm:$0xff]
    %v1573 = vld [vmem:[#allocation8 + $0x178] sm:$0xff]
    %v1574 = vld [vmem:[#allocation8 + $0x180] sm:$0xff]
    %v1575 = vld [vmem:[#allocation8 + $0x188] sm:$0xff]
    %v1576 = vld [vmem:[#allocation8 + $0x190] sm:$0xff]
    %v1577 = vld [vmem:[#allocation8 + $0x198] sm:$0xff]
    %v1578 = vld [vmem:[#allocation8 + $0x1a0] sm:$0xff]
    %v1579 = vld [vmem:[#allocation8 + $0x1a8] sm:$0xff]
    %v1580 = vld [vmem:[#allocation8 + $0x1b0] sm:$0xff]
    %v1581 = vld [vmem:[#allocation8 + $0x1b8] sm:$0xff]
    %v1582 = vld [vmem:[#allocation8 + $0x1c0] sm:$0xff]
    %v1583 = vld [vmem:[#allocation8 + $0x1c8] sm:$0xff]
    %v1584 = vld [vmem:[#allocation8 + $0x1d0] sm:$0xff]
    %v1585 = vld [vmem:[#allocation8 + $0x1d8] sm:$0xff]
    %v1586 = vld [vmem:[#allocation8 + $0x1e0] sm:$0xff]
    %v1587 = vld [vmem:[#allocation8 + $0x1e8] sm:$0xff]
    %v1588 = vld [vmem:[#allocation8 + $0x1f0] sm:$0xff]
    %v1589 = vld [vmem:[#allocation8 + $0x1f8] sm:$0xff]
    %v1590 = vld [vmem:[#allocation8 + $0x200] sm:$0xff]
    %v1591 = vld [vmem:[#allocation8 + $0x208] sm:$0xff]
    %v1592 = vld [vmem:[#allocation8 + $0x210] sm:$0xff]
    %v1593 = vld [vmem:[#allocation8 + $0x218] sm:$0xff]
    %v1594 = vld [vmem:[#allocation8 + $0x220] sm:$0xff]
    %v1595 = vld [vmem:[#allocation8 + $0x228] sm:$0xff]
    %v1596 = vld [vmem:[#allocation8 + $0x230] sm:$0xff]
    %v1597 = vld [vmem:[#allocation8 + $0x238] sm:$0xff]
    %v1598 = vld [vmem:[#allocation8 + $0x240] sm:$0xff]
    %v1599 = vld [vmem:[#allocation8 + $0x248] sm:$0xff]
    %v1600 = vld [vmem:[#allocation8 + $0x250] sm:$0xff]
    %v1601 = vld [vmem:[#allocation8 + $0x258] sm:$0xff]
    %v1602 = vld [vmem:[#allocation8 + $0x260] sm:$0xff]
    %v1603 = vld [vmem:[#allocation8 + $0x268] sm:$0xff]
    %v1604 = vld [vmem:[#allocation8 + $0x270] sm:$0xff]
    %v1605 = vld [vmem:[#allocation8 + $0x278] sm:$0xff]
    %v1606 = vld [vmem:[#allocation8 + $0x280] sm:$0xff]
    %v1607 = vld [vmem:[#allocation8 + $0x288] sm:$0xff]
    %v1608 = vld [vmem:[#allocation8 + $0x290] sm:$0xff]
    %v1609 = vld [vmem:[#allocation8 + $0x298] sm:$0xff]
    %v1610 = vld [vmem:[#allocation8 + $0x2a0] sm:$0xff]
    %v1611 = vld [vmem:[#allocation8 + $0x2a8] sm:$0xff]
    %v1612 = vld [vmem:[#allocation8 + $0x2b0] sm:$0xff]
    %v1613 = vld [vmem:[#allocation8 + $0x2b8] sm:$0xff]
    %v1614 = vld [vmem:[#allocation8 + $0x2c0] sm:$0xff]
    %v1615 = vld [vmem:[#allocation8 + $0x2c8] sm:$0xff]
    %v1616 = vld [vmem:[#allocation8 + $0x2d0] sm:$0xff]
    %v1617 = vld [vmem:[#allocation8 + $0x2d8] sm:$0xff]
    %v1618 = vld [vmem:[#allocation8 + $0x2e0] sm:$0xff]
    %v1619 = vld [vmem:[#allocation8 + $0x2e8] sm:$0xff]
    %v1620 = vld [vmem:[#allocation8 + $0x2f0] sm:$0xff]
    %v1621 = vld [vmem:[#allocation8 + $0x2f8] sm:$0xff]
    %v1622 = vld [vmem:[#allocation8 + $0x300] sm:$0xff]
    %v1623 = vld [vmem:[#allocation8 + $0x308] sm:$0xff]
    %v1624 = vld [vmem:[#allocation8 + $0x310] sm:$0xff]
    %v1625 = vld [vmem:[#allocation8 + $0x318] sm:$0xff]
    %v1626 = vld [vmem:[#allocation8 + $0x320] sm:$0xff]
    %v1627 = vld [vmem:[#allocation8 + $0x328] sm:$0xff]
    %v1628 = vld [vmem:[#allocation8 + $0x330] sm:$0xff]
    %v1629 = vld [vmem:[#allocation8 + $0x338] sm:$0xff]
    %v1630 = vld [vmem:[#allocation8 + $0x340] sm:$0xff]
    %v1631 = vld [vmem:[#allocation8 + $0x348] sm:$0xff]
    %v1632 = vld [vmem:[#allocation8 + $0x350] sm:$0xff]
    %v1633 = vld [vmem:[#allocation8 + $0x358] sm:$0xff]
    %v1634 = vld [vmem:[#allocation8 + $0x360] sm:$0xff]
    %v1635 = vld [vmem:[#allocation8 + $0x368] sm:$0xff]
    %v1636 = vld [vmem:[#allocation8 + $0x370] sm:$0xff]
    %v1637 = vld [vmem:[#allocation8 + $0x378] sm:$0xff]
    %v1638 = vld [vmem:[#allocation8 + $0x380] sm:$0xff]
    %v1639 = vld [vmem:[#allocation8 + $0x388] sm:$0xff]
    %v1640 = vld [vmem:[#allocation8 + $0x390] sm:$0xff]
    %v1641 = vld [vmem:[#allocation8 + $0x398] sm:$0xff]
    %v1642 = vld [vmem:[#allocation8 + $0x3a0] sm:$0xff]
    %v1643 = vld [vmem:[#allocation8 + $0x3a8] sm:$0xff]
    %v1644 = vld [vmem:[#allocation8 + $0x3b0] sm:$0xff]
    %v1645 = vld [vmem:[#allocation8 + $0x3b8] sm:$0xff]
    %v1646 = vld [vmem:[#allocation8 + $0x3c0] sm:$0xff]
    %v1647 = vld [vmem:[#allocation8 + $0x3c8] sm:$0xff]
    %v1648 = vld [vmem:[#allocation8 + $0x3d0] sm:$0xff]
    %v1649 = vld [vmem:[#allocation8 + $0x3d8] sm:$0xff]
    %v1650 = vld [vmem:[#allocation8 + $0x3e0] sm:$0xff]
    %v1651 = vld [vmem:[#allocation8 + $0x3e8] sm:$0xff]
    %v1652 = vld [vmem:[#allocation8 + $0x3f0] sm:$0xff]
    %v1653 = vld [vmem:[#allocation8 + $0x3f8] sm:$0xff]
    %s1654 = scalar_lea.vmem [#allocation11], 2
    %v1655 = vld [vmem:[%s1654] ss:$4 sm:$0xf]
    %v1657 = vlaneseq
    %v1658 = vshrl.u32 %v1657, 7
    %v1659 = vsub.s32 0, %v1658
    %v1660 = vrot.slane %v1655, %v1659
    %v1661 = vlaneseq
    %v1662 = vshrl.u32 %v1661, 7
    %v1663 = vsub.s32 1, %v1662
    %v1664 = vrot.slane %v1655, %v1663
    %v1665 = vlaneseq
    %v1666 = vshrl.u32 %v1665, 7
    %v1667 = vsub.s32 2, %v1666
    %v1668 = vrot.slane %v1655, %v1667
    %v1669 = vlaneseq
    %v1670 = vshrl.u32 %v1669, 7
    %v1671 = vsub.s32 3, %v1670
    %v1672 = vrot.slane %v1655, %v1671
    %v1805 = vunpack.c.l.b16 %v1526
    %v1806 = vunpack.c.h.b16 %v1526
    %v1807 = vunpack.c.l.b16 %v1527
    %v1808 = vunpack.c.h.b16 %v1527
    %v1809 = vunpack.c.l.b16 %v1528
    %v1810 = vunpack.c.h.b16 %v1528
    %v1811 = vunpack.c.l.b16 %v1529
    %v1812 = vunpack.c.h.b16 %v1529
    %v1813 = vunpack.c.l.b16 %v1530
    %v1814 = vunpack.c.h.b16 %v1530
    %v1815 = vunpack.c.l.b16 %v1531
    %v1816 = vunpack.c.h.b16 %v1531
    %v1817 = vunpack.c.l.b16 %v1532
    %v1818 = vunpack.c.h.b16 %v1532
    %v1819 = vunpack.c.l.b16 %v1533
    %v1820 = vunpack.c.h.b16 %v1533
    %v1821 = vunpack.c.l.b16 %v1534
    %v1822 = vunpack.c.h.b16 %v1534
    %v1823 = vunpack.c.l.b16 %v1535
    %v1824 = vunpack.c.h.b16 %v1535
    %v1825 = vunpack.c.l.b16 %v1536
    %v1826 = vunpack.c.h.b16 %v1536
    %v1827 = vunpack.c.l.b16 %v1537
    %v1828 = vunpack.c.h.b16 %v1537
    %v1829 = vunpack.c.l.b16 %v1538
    %v1830 = vunpack.c.h.b16 %v1538
    %v1831 = vunpack.c.l.b16 %v1539
    %v1832 = vunpack.c.h.b16 %v1539
    %v1833 = vunpack.c.l.b16 %v1540
    %v1834 = vunpack.c.h.b16 %v1540
    %v1835 = vunpack.c.l.b16 %v1541
    %v1836 = vunpack.c.h.b16 %v1541
    %v1837 = vunpack.c.l.b16 %v1542
    %v1838 = vunpack.c.h.b16 %v1542
    %v1839 = vunpack.c.l.b16 %v1543
    %v1840 = vunpack.c.h.b16 %v1543
    %v1841 = vunpack.c.l.b16 %v1544
    %v1842 = vunpack.c.h.b16 %v1544
    %v1843 = vunpack.c.l.b16 %v1545
    %v1844 = vunpack.c.h.b16 %v1545
    %v1845 = vunpack.c.l.b16 %v1546
    %v1846 = vunpack.c.h.b16 %v1546
    %v1847 = vunpack.c.l.b16 %v1547
    %v1848 = vunpack.c.h.b16 %v1547
    %v1849 = vunpack.c.l.b16 %v1548
    %v1850 = vunpack.c.h.b16 %v1548
    %v1851 = vunpack.c.l.b16 %v1549
    %v1852 = vunpack.c.h.b16 %v1549
    %v1853 = vunpack.c.l.b16 %v1550
    %v1854 = vunpack.c.h.b16 %v1550
    %v1855 = vunpack.c.l.b16 %v1551
    %v1856 = vunpack.c.h.b16 %v1551
    %v1857 = vunpack.c.l.b16 %v1552
    %v1858 = vunpack.c.h.b16 %v1552
    %v1859 = vunpack.c.l.b16 %v1553
    %v1860 = vunpack.c.h.b16 %v1553
    %v1861 = vunpack.c.l.b16 %v1554
    %v1862 = vunpack.c.h.b16 %v1554
    %v1863 = vunpack.c.l.b16 %v1555
    %v1864 = vunpack.c.h.b16 %v1555
    %v1865 = vunpack.c.l.b16 %v1556
    %v1866 = vunpack.c.h.b16 %v1556
    %v1867 = vunpack.c.l.b16 %v1557
    %v1868 = vunpack.c.h.b16 %v1557
    %v1869 = vunpack.c.l.b16 %v1558
    %v1870 = vunpack.c.h.b16 %v1558
    %v1871 = vunpack.c.l.b16 %v1559
    %v1872 = vunpack.c.h.b16 %v1559
    %v1873 = vunpack.c.l.b16 %v1560
    %v1874 = vunpack.c.h.b16 %v1560
    %v1875 = vunpack.c.l.b16 %v1561
    %v1876 = vunpack.c.h.b16 %v1561
    %v1877 = vunpack.c.l.b16 %v1562
    %v1878 = vunpack.c.h.b16 %v1562
    %v1879 = vunpack.c.l.b16 %v1563
    %v1880 = vunpack.c.h.b16 %v1563
    %v1881 = vunpack.c.l.b16 %v1564
    %v1882 = vunpack.c.h.b16 %v1564
    %v1883 = vunpack.c.l.b16 %v1565
    %v1884 = vunpack.c.h.b16 %v1565
    %v1885 = vunpack.c.l.b16 %v1566
    %v1886 = vunpack.c.h.b16 %v1566
    %v1887 = vunpack.c.l.b16 %v1567
    %v1888 = vunpack.c.h.b16 %v1567
    %v1889 = vunpack.c.l.b16 %v1568
    %v1890 = vunpack.c.h.b16 %v1568
    %v1891 = vunpack.c.l.b16 %v1569
    %v1892 = vunpack.c.h.b16 %v1569
    %v1893 = vunpack.c.l.b16 %v1570
    %v1894 = vunpack.c.h.b16 %v1570
    %v1895 = vunpack.c.l.b16 %v1571
    %v1896 = vunpack.c.h.b16 %v1571
    %v1897 = vunpack.c.l.b16 %v1572
    %v1898 = vunpack.c.h.b16 %v1572
    %v1899 = vunpack.c.l.b16 %v1573
    %v1900 = vunpack.c.h.b16 %v1573
    %v1901 = vunpack.c.l.b16 %v1574
    %v1902 = vunpack.c.h.b16 %v1574
    %v1903 = vunpack.c.l.b16 %v1575
    %v1904 = vunpack.c.h.b16 %v1575
    %v1905 = vunpack.c.l.b16 %v1576
    %v1906 = vunpack.c.h.b16 %v1576
    %v1907 = vunpack.c.l.b16 %v1577
    %v1908 = vunpack.c.h.b16 %v1577
    %v1909 = vunpack.c.l.b16 %v1578
    %v1910 = vunpack.c.h.b16 %v1578
    %v1911 = vunpack.c.l.b16 %v1579
    %v1912 = vunpack.c.h.b16 %v1579
    %v1913 = vunpack.c.l.b16 %v1580
    %v1914 = vunpack.c.h.b16 %v1580
    %v1915 = vunpack.c.l.b16 %v1581
    %v1916 = vunpack.c.h.b16 %v1581
    %v1917 = vunpack.c.l.b16 %v1582
    %v1918 = vunpack.c.h.b16 %v1582
    %v1919 = vunpack.c.l.b16 %v1583
    %v1920 = vunpack.c.h.b16 %v1583
    %v1921 = vunpack.c.l.b16 %v1584
    %v1922 = vunpack.c.h.b16 %v1584
    %v1923 = vunpack.c.l.b16 %v1585
    %v1924 = vunpack.c.h.b16 %v1585
    %v1925 = vunpack.c.l.b16 %v1586
    %v1926 = vunpack.c.h.b16 %v1586
    %v1927 = vunpack.c.l.b16 %v1587
    %v1928 = vunpack.c.h.b16 %v1587
    %v1929 = vunpack.c.l.b16 %v1588
    %v1930 = vunpack.c.h.b16 %v1588
    %v1931 = vunpack.c.l.b16 %v1589
    %v1932 = vunpack.c.h.b16 %v1589
    %v1933 = vunpack.c.l.b16 %v1590
    %v1934 = vunpack.c.h.b16 %v1590
    %v1935 = vunpack.c.l.b16 %v1591
    %v1936 = vunpack.c.h.b16 %v1591
    %v1937 = vunpack.c.l.b16 %v1592
    %v1938 = vunpack.c.h.b16 %v1592
    %v1939 = vunpack.c.l.b16 %v1593
    %v1940 = vunpack.c.h.b16 %v1593
    %v1941 = vunpack.c.l.b16 %v1594
    %v1942 = vunpack.c.h.b16 %v1594
    %v1943 = vunpack.c.l.b16 %v1595
    %v1944 = vunpack.c.h.b16 %v1595
    %v1945 = vunpack.c.l.b16 %v1596
    %v1946 = vunpack.c.h.b16 %v1596
    %v1947 = vunpack.c.l.b16 %v1597
    %v1948 = vunpack.c.h.b16 %v1597
    %v1949 = vunpack.c.l.b16 %v1598
    %v1950 = vunpack.c.h.b16 %v1598
    %v1951 = vunpack.c.l.b16 %v1599
    %v1952 = vunpack.c.h.b16 %v1599
    %v1953 = vunpack.c.l.b16 %v1600
    %v1954 = vunpack.c.h.b16 %v1600
    %v1955 = vunpack.c.l.b16 %v1601
    %v1956 = vunpack.c.h.b16 %v1601
    %v1957 = vunpack.c.l.b16 %v1602
    %v1958 = vunpack.c.h.b16 %v1602
    %v1959 = vunpack.c.l.b16 %v1603
    %v1960 = vunpack.c.h.b16 %v1603
    %v1961 = vunpack.c.l.b16 %v1604
    %v1962 = vunpack.c.h.b16 %v1604
    %v1963 = vunpack.c.l.b16 %v1605
    %v1964 = vunpack.c.h.b16 %v1605
    %v1965 = vunpack.c.l.b16 %v1606
    %v1966 = vunpack.c.h.b16 %v1606
    %v1967 = vunpack.c.l.b16 %v1607
    %v1968 = vunpack.c.h.b16 %v1607
    %v1969 = vunpack.c.l.b16 %v1608
    %v1970 = vunpack.c.h.b16 %v1608
    %v1971 = vunpack.c.l.b16 %v1609
    %v1972 = vunpack.c.h.b16 %v1609
    %v1973 = vunpack.c.l.b16 %v1610
    %v1974 = vunpack.c.h.b16 %v1610
    %v1975 = vunpack.c.l.b16 %v1611
    %v1976 = vunpack.c.h.b16 %v1611
    %v1977 = vunpack.c.l.b16 %v1612
    %v1978 = vunpack.c.h.b16 %v1612
    %v1979 = vunpack.c.l.b16 %v1613
    %v1980 = vunpack.c.h.b16 %v1613
    %v1981 = vunpack.c.l.b16 %v1614
    %v1982 = vunpack.c.h.b16 %v1614
    %v1983 = vunpack.c.l.b16 %v1615
    %v1984 = vunpack.c.h.b16 %v1615
    %v1985 = vunpack.c.l.b16 %v1616
    %v1986 = vunpack.c.h.b16 %v1616
    %v1987 = vunpack.c.l.b16 %v1617
    %v1988 = vunpack.c.h.b16 %v1617
    %v1989 = vunpack.c.l.b16 %v1618
    %v1990 = vunpack.c.h.b16 %v1618
    %v1991 = vunpack.c.l.b16 %v1619
    %v1992 = vunpack.c.h.b16 %v1619
    %v1993 = vunpack.c.l.b16 %v1620
    %v1994 = vunpack.c.h.b16 %v1620
    %v1995 = vunpack.c.l.b16 %v1621
    %v1996 = vunpack.c.h.b16 %v1621
    %v1997 = vunpack.c.l.b16 %v1622
    %v1998 = vunpack.c.h.b16 %v1622
    %v1999 = vunpack.c.l.b16 %v1623
    %v2000 = vunpack.c.h.b16 %v1623
    %v2001 = vunpack.c.l.b16 %v1624
    %v2002 = vunpack.c.h.b16 %v1624
    %v2003 = vunpack.c.l.b16 %v1625
    %v2004 = vunpack.c.h.b16 %v1625
    %v2005 = vunpack.c.l.b16 %v1626
    %v2006 = vunpack.c.h.b16 %v1626
    %v2007 = vunpack.c.l.b16 %v1627
    %v2008 = vunpack.c.h.b16 %v1627
    %v2009 = vunpack.c.l.b16 %v1628
    %v2010 = vunpack.c.h.b16 %v1628
    %v2011 = vunpack.c.l.b16 %v1629
    %v2012 = vunpack.c.h.b16 %v1629
    %v2013 = vunpack.c.l.b16 %v1630
    %v2014 = vunpack.c.h.b16 %v1630
    %v2015 = vunpack.c.l.b16 %v1631
    %v2016 = vunpack.c.h.b16 %v1631
    %v2017 = vunpack.c.l.b16 %v1632
    %v2018 = vunpack.c.h.b16 %v1632
    %v2019 = vunpack.c.l.b16 %v1633
    %v2020 = vunpack.c.h.b16 %v1633
    %v2021 = vunpack.c.l.b16 %v1634
    %v2022 = vunpack.c.h.b16 %v1634
    %v2023 = vunpack.c.l.b16 %v1635
    %v2024 = vunpack.c.h.b16 %v1635
    %v2025 = vunpack.c.l.b16 %v1636
    %v2026 = vunpack.c.h.b16 %v1636
    %v2027 = vunpack.c.l.b16 %v1637
    %v2028 = vunpack.c.h.b16 %v1637
    %v2029 = vunpack.c.l.b16 %v1638
    %v2030 = vunpack.c.h.b16 %v1638
    %v2031 = vunpack.c.l.b16 %v1639
    %v2032 = vunpack.c.h.b16 %v1639
    %v2033 = vunpack.c.l.b16 %v1640
    %v2034 = vunpack.c.h.b16 %v1640
    %v2035 = vunpack.c.l.b16 %v1641
    %v2036 = vunpack.c.h.b16 %v1641
    %v2037 = vunpack.c.l.b16 %v1642
    %v2038 = vunpack.c.h.b16 %v1642
    %v2039 = vunpack.c.l.b16 %v1643
    %v2040 = vunpack.c.h.b16 %v1643
    %v2041 = vunpack.c.l.b16 %v1644
    %v2042 = vunpack.c.h.b16 %v1644
    %v2043 = vunpack.c.l.b16 %v1645
    %v2044 = vunpack.c.h.b16 %v1645
    %v2045 = vunpack.c.l.b16 %v1646
    %v2046 = vunpack.c.h.b16 %v1646
    %v2047 = vunpack.c.l.b16 %v1647
    %v2048 = vunpack.c.h.b16 %v1647
    %v2049 = vunpack.c.l.b16 %v1648
    %v2050 = vunpack.c.h.b16 %v1648
    %v2051 = vunpack.c.l.b16 %v1649
    %v2052 = vunpack.c.h.b16 %v1649
    %v2053 = vunpack.c.l.b16 %v1650
    %v2054 = vunpack.c.h.b16 %v1650
    %v2055 = vunpack.c.l.b16 %v1651
    %v2056 = vunpack.c.h.b16 %v1651
    %v2057 = vunpack.c.l.b16 %v1652
    %v2058 = vunpack.c.h.b16 %v1652
    %v2059 = vunpack.c.l.b16 %v1653
    %v2060 = vunpack.c.h.b16 %v1653
    %v2061 = vpack.c.b16 %v1809, %v1805
    %v2062 = vpack.c.b16 %v1810, %v1806
    %v2063 = vpack.c.b16 %v1811, %v1807
    %v2064 = vpack.c.b16 %v1812, %v1808
    %v2065 = vpack.c.b16 %v1817, %v1813
    %v2066 = vpack.c.b16 %v1818, %v1814
    %v2067 = vpack.c.b16 %v1819, %v1815
    %v2068 = vpack.c.b16 %v1820, %v1816
    %v2069 = vpack.c.b16 %v1825, %v1821
    %v2070 = vpack.c.b16 %v1826, %v1822
    %v2071 = vpack.c.b16 %v1827, %v1823
    %v2072 = vpack.c.b16 %v1828, %v1824
    %v2073 = vpack.c.b16 %v1833, %v1829
    %v2074 = vpack.c.b16 %v1834, %v1830
    %v2075 = vpack.c.b16 %v1835, %v1831
    %v2076 = vpack.c.b16 %v1836, %v1832
    %v2077 = vpack.c.b16 %v1841, %v1837
    %v2078 = vpack.c.b16 %v1842, %v1838
    %v2079 = vpack.c.b16 %v1843, %v1839
    %v2080 = vpack.c.b16 %v1844, %v1840
    %v2081 = vpack.c.b16 %v1849, %v1845
    %v2082 = vpack.c.b16 %v1850, %v1846
    %v2083 = vpack.c.b16 %v1851, %v1847
    %v2084 = vpack.c.b16 %v1852, %v1848
    %v2085 = vpack.c.b16 %v1857, %v1853
    %v2086 = vpack.c.b16 %v1858, %v1854
    %v2087 = vpack.c.b16 %v1859, %v1855
    %v2088 = vpack.c.b16 %v1860, %v1856
    %v2089 = vpack.c.b16 %v1865, %v1861
    %v2090 = vpack.c.b16 %v1866, %v1862
    %v2091 = vpack.c.b16 %v1867, %v1863
    %v2092 = vpack.c.b16 %v1868, %v1864
    %v2093 = vpack.c.b16 %v1873, %v1869
    %v2094 = vpack.c.b16 %v1874, %v1870
    %v2095 = vpack.c.b16 %v1875, %v1871
    %v2096 = vpack.c.b16 %v1876, %v1872
    %v2097 = vpack.c.b16 %v1881, %v1877
    %v2098 = vpack.c.b16 %v1882, %v1878
    %v2099 = vpack.c.b16 %v1883, %v1879
    %v2100 = vpack.c.b16 %v1884, %v1880
    %v2101 = vpack.c.b16 %v1889, %v1885
    %v2102 = vpack.c.b16 %v1890, %v1886
    %v2103 = vpack.c.b16 %v1891, %v1887
    %v2104 = vpack.c.b16 %v1892, %v1888
    %v2105 = vpack.c.b16 %v1897, %v1893
    %v2106 = vpack.c.b16 %v1898, %v1894
    %v2107 = vpack.c.b16 %v1899, %v1895
    %v2108 = vpack.c.b16 %v1900, %v1896
    %v2109 = vpack.c.b16 %v1905, %v1901
    %v2110 = vpack.c.b16 %v1906, %v1902
    %v2111 = vpack.c.b16 %v1907, %v1903
    %v2112 = vpack.c.b16 %v1908, %v1904
    %v2113 = vpack.c.b16 %v1913, %v1909
    %v2114 = vpack.c.b16 %v1914, %v1910
    %v2115 = vpack.c.b16 %v1915, %v1911
    %v2116 = vpack.c.b16 %v1916, %v1912
    %v2117 = vpack.c.b16 %v1921, %v1917
    %v2118 = vpack.c.b16 %v1922, %v1918
    %v2119 = vpack.c.b16 %v1923, %v1919
    %v2120 = vpack.c.b16 %v1924, %v1920
    %v2121 = vpack.c.b16 %v1929, %v1925
    %v2122 = vpack.c.b16 %v1930, %v1926
    %v2123 = vpack.c.b16 %v1931, %v1927
    %v2124 = vpack.c.b16 %v1932, %v1928
    %v2125 = vpack.c.b16 %v1937, %v1933
    %v2126 = vpack.c.b16 %v1938, %v1934
    %v2127 = vpack.c.b16 %v1939, %v1935
    %v2128 = vpack.c.b16 %v1940, %v1936
    %v2129 = vpack.c.b16 %v1945, %v1941
    %v2130 = vpack.c.b16 %v1946, %v1942
    %v2131 = vpack.c.b16 %v1947, %v1943
    %v2132 = vpack.c.b16 %v1948, %v1944
    %v2133 = vpack.c.b16 %v1953, %v1949
    %v2134 = vpack.c.b16 %v1954, %v1950
    %v2135 = vpack.c.b16 %v1955, %v1951
    %v2136 = vpack.c.b16 %v1956, %v1952
    %v2137 = vpack.c.b16 %v1961, %v1957
    %v2138 = vpack.c.b16 %v1962, %v1958
    %v2139 = vpack.c.b16 %v1963, %v1959
    %v2140 = vpack.c.b16 %v1964, %v1960
    %v2141 = vpack.c.b16 %v1969, %v1965
    %v2142 = vpack.c.b16 %v1970, %v1966
    %v2143 = vpack.c.b16 %v1971, %v1967
    %v2144 = vpack.c.b16 %v1972, %v1968
    %v2145 = vpack.c.b16 %v1977, %v1973
    %v2146 = vpack.c.b16 %v1978, %v1974
    %v2147 = vpack.c.b16 %v1979, %v1975
    %v2148 = vpack.c.b16 %v1980, %v1976
    %v2149 = vpack.c.b16 %v1985, %v1981
    %v2150 = vpack.c.b16 %v1986, %v1982
    %v2151 = vpack.c.b16 %v1987, %v1983
    %v2152 = vpack.c.b16 %v1988, %v1984
    %v2153 = vpack.c.b16 %v1993, %v1989
    %v2154 = vpack.c.b16 %v1994, %v1990
    %v2155 = vpack.c.b16 %v1995, %v1991
    %v2156 = vpack.c.b16 %v1996, %v1992
    %v2157 = vpack.c.b16 %v2001, %v1997
    %v2158 = vpack.c.b16 %v2002, %v1998
    %v2159 = vpack.c.b16 %v2003, %v1999
    %v2160 = vpack.c.b16 %v2004, %v2000
    %v2161 = vpack.c.b16 %v2009, %v2005
    %v2162 = vpack.c.b16 %v2010, %v2006
    %v2163 = vpack.c.b16 %v2011, %v2007
    %v2164 = vpack.c.b16 %v2012, %v2008
    %v2165 = vpack.c.b16 %v2017, %v2013
    %v2166 = vpack.c.b16 %v2018, %v2014
    %v2167 = vpack.c.b16 %v2019, %v2015
    %v2168 = vpack.c.b16 %v2020, %v2016
    %v2169 = vpack.c.b16 %v2025, %v2021
    %v2170 = vpack.c.b16 %v2026, %v2022
    %v2171 = vpack.c.b16 %v2027, %v2023
    %v2172 = vpack.c.b16 %v2028, %v2024
    %v2173 = vpack.c.b16 %v2033, %v2029
    %v2174 = vpack.c.b16 %v2034, %v2030
    %v2175 = vpack.c.b16 %v2035, %v2031
    %v2176 = vpack.c.b16 %v2036, %v2032
    %v2177 = vpack.c.b16 %v2041, %v2037
    %v2178 = vpack.c.b16 %v2042, %v2038
    %v2179 = vpack.c.b16 %v2043, %v2039
    %v2180 = vpack.c.b16 %v2044, %v2040
    %v2181 = vpack.c.b16 %v2049, %v2045
    %v2182 = vpack.c.b16 %v2050, %v2046
    %v2183 = vpack.c.b16 %v2051, %v2047
    %v2184 = vpack.c.b16 %v2052, %v2048
    %v2185 = vpack.c.b16 %v2057, %v2053
    %v2186 = vpack.c.b16 %v2058, %v2054
    %v2187 = vpack.c.b16 %v2059, %v2055
    %v2188 = vpack.c.b16 %v2060, %v2056
    %2317 = vmatprep.subr.bf16.mxu0 %v2062
    %2318 = vmatpush1.bf16.msra.mxu0 %v2061
    %2319 = vmatprep.subr.bf16.mxu0 %v2066
    %2320 = vmatpush1.bf16.msra.mxu0 %v2065
    %2321 = vmatprep.subr.bf16.mxu0 %v2070
    %2322 = vmatpush1.bf16.msra.mxu0 %v2069
    %2323 = vmatprep.subr.bf16.mxu0 %v2074
    %2324 = vmatpush1.bf16.msra.mxu0 %v2073
    %2325 = vmatprep.subr.bf16.mxu0 %v2078
    %2326 = vmatpush1.bf16.msra.mxu0 %v2077
    %2327 = vmatprep.subr.bf16.mxu0 %v2082
    %2328 = vmatpush1.bf16.msra.mxu0 %v2081
    %2329 = vmatprep.subr.bf16.mxu0 %v2086
    %2330 = vmatpush1.bf16.msra.mxu0 %v2085
    %2331 = vmatprep.subr.bf16.mxu0 %v2090
    %2332 = vmatpush1.bf16.msra.mxu0 %v2089
    %2333 = vmatprep.subr.bf16.mxu0 %v2094
    %2334 = vmatpush1.bf16.msra.mxu0 %v2093
    %2335 = vmatprep.subr.bf16.mxu0 %v2098
    %2336 = vmatpush1.bf16.msra.mxu0 %v2097
    %2337 = vmatprep.subr.bf16.mxu0 %v2102
    %2338 = vmatpush1.bf16.msra.mxu0 %v2101
    %2339 = vmatprep.subr.bf16.mxu0 %v2106
    %2340 = vmatpush1.bf16.msra.mxu0 %v2105
    %2341 = vmatprep.subr.bf16.mxu0 %v2110
    %2342 = vmatpush1.bf16.msra.mxu0 %v2109
    %2343 = vmatprep.subr.bf16.mxu0 %v2114
    %2344 = vmatpush1.bf16.msra.mxu0 %v2113
    %2345 = vmatprep.subr.bf16.mxu0 %v2118
    %2346 = vmatpush1.bf16.msra.mxu0 %v2117
    %2347 = vmatprep.subr.bf16.mxu0 %v2122
    %2348 = vmatpush1.bf16.msra.mxu0 %v2121
    %2349 = vmatprep.mubr.bf16.mxu0 %v1523
    %2350 = vmatmul.mubr.bf16.gmra.mrb[0].mxu0 %v1522
    %v2351 = vpop.f32.mrb[0].mxu0
    %v2352 = vadd.f32 %v1660, %v2351
    %v2353 = vpop.f32.mrb[0].mxu0
    %v2354 = vadd.f32 %v1664, %v2353
    %v2355 = vpop.f32.mrb[0].mxu0
    %v2356 = vpop.f32.mrb[0].mxu0
    %2357 = vdwg.mxu0
    %2358 = vmatprep.subr.bf16.mxu0 %v2126
    %2359 = vmatpush1.bf16.msra.mxu0 %v2125
    %2360 = vmatprep.subr.bf16.mxu0 %v2130
    %2361 = vmatpush1.bf16.msra.mxu0 %v2129
    %2362 = vmatprep.subr.bf16.mxu0 %v2134
    %2363 = vmatpush1.bf16.msra.mxu0 %v2133
    %2364 = vmatprep.subr.bf16.mxu0 %v2138
    %2365 = vmatpush1.bf16.msra.mxu0 %v2137
    %2366 = vmatprep.subr.bf16.mxu0 %v2142
    %2367 = vmatpush1.bf16.msra.mxu0 %v2141
    %2368 = vmatprep.subr.bf16.mxu0 %v2146
    %2369 = vmatpush1.bf16.msra.mxu0 %v2145
    %2370 = vmatprep.subr.bf16.mxu0 %v2150
    %2371 = vmatpush1.bf16.msra.mxu0 %v2149
    %2372 = vmatprep.subr.bf16.mxu0 %v2154
    %2373 = vmatpush1.bf16.msra.mxu0 %v2153
    %2374 = vmatprep.subr.bf16.mxu0 %v2158
    %2375 = vmatpush1.bf16.msra.mxu0 %v2157
    %2376 = vmatprep.subr.bf16.mxu0 %v2162
    %2377 = vmatpush1.bf16.msra.mxu0 %v2161
    %2378 = vmatprep.subr.bf16.mxu0 %v2166
    %2379 = vmatpush1.bf16.msra.mxu0 %v2165
    %2380 = vmatprep.subr.bf16.mxu0 %v2170
    %2381 = vmatpush1.bf16.msra.mxu0 %v2169
    %2382 = vmatprep.subr.bf16.mxu0 %v2174
    %2383 = vmatpush1.bf16.msra.mxu0 %v2173
    %2384 = vmatprep.subr.bf16.mxu0 %v2178
    %2385 = vmatpush1.bf16.msra.mxu0 %v2177
    %2386 = vmatprep.subr.bf16.mxu0 %v2182
    %2387 = vmatpush1.bf16.msra.mxu0 %v2181
    %2388 = vmatprep.subr.bf16.mxu0 %v2186
    %2389 = vmatpush1.bf16.msra.mxu0 %v2185
    %2390 = vmatprep.mubr.bf16.mxu0 %v1525
    %2391 = vmatmul.mubr.bf16.gmra.mrb[0].mxu0 %v1524
    %v2392 = vpop.f32.mrb[0].mxu0
    %v2393 = vadd.f32 %v2352, %v2392
    %v2394 = vpop.f32.mrb[0].mxu0
    %v2395 = vadd.f32 %v2354, %v2394
    %v2396 = vpop.f32.mrb[0].mxu0
    %v2397 = vpop.f32.mrb[0].mxu0
    %2398 = vdwg.mxu0
    %2399 = vmatprep.subr.bf16.mxu0 %v2064
    %2400 = vmatpush1.bf16.msra.mxu0 %v2063
    %2401 = vmatprep.subr.bf16.mxu0 %v2068
    %2402 = vmatpush1.bf16.msra.mxu0 %v2067
    %2403 = vmatprep.subr.bf16.mxu0 %v2072
    %2404 = vmatpush1.bf16.msra.mxu0 %v2071
    %2405 = vmatprep.subr.bf16.mxu0 %v2076
    %2406 = vmatpush1.bf16.msra.mxu0 %v2075
    %2407 = vmatprep.subr.bf16.mxu0 %v2080
    %2408 = vmatpush1.bf16.msra.mxu0 %v2079
    %2409 = vmatprep.subr.bf16.mxu0 %v2084
    %2410 = vmatpush1.bf16.msra.mxu0 %v2083
    %2411 = vmatprep.subr.bf16.mxu0 %v2088
    %2412 = vmatpush1.bf16.msra.mxu0 %v2087
    %2413 = vmatprep.subr.bf16.mxu0 %v2092
    %2414 = vmatpush1.bf16.msra.mxu0 %v2091
    %2415 = vmatprep.subr.bf16.mxu0 %v2096
    %2416 = vmatpush1.bf16.msra.mxu0 %v2095
    %2417 = vmatprep.subr.bf16.mxu0 %v2100
    %2418 = vmatpush1.bf16.msra.mxu0 %v2099
    %2419 = vmatprep.subr.bf16.mxu0 %v2104
    %2420 = vmatpush1.bf16.msra.mxu0 %v2103
    %2421 = vmatprep.subr.bf16.mxu0 %v2108
    %2422 = vmatpush1.bf16.msra.mxu0 %v2107
    %2423 = vmatprep.subr.bf16.mxu0 %v2112
    %2424 = vmatpush1.bf16.msra.mxu0 %v2111
    %2425 = vmatprep.subr.bf16.mxu0 %v2116
    %2426 = vmatpush1.bf16.msra.mxu0 %v2115
    %2427 = vmatprep.subr.bf16.mxu0 %v2120
    %2428 = vmatpush1.bf16.msra.mxu0 %v2119
    %2429 = vmatprep.subr.bf16.mxu0 %v2124
    %2430 = vmatpush1.bf16.msra.mxu0 %v2123
    %2431 = vmatprep.mubr.bf16.mxu0 %v1523
    %2432 = vmatmul.mubr.bf16.gmra.mrb[0].mxu0 %v1522
    %v2433 = vpop.f32.mrb[0].mxu0
    %v2434 = vadd.f32 %v1668, %v2433
    %v2435 = vpop.f32.mrb[0].mxu0
    %v2436 = vadd.f32 %v1672, %v2435
    %v2437 = vpop.f32.mrb[0].mxu0
    %v2438 = vpop.f32.mrb[0].mxu0
    %2439 = vdwg.mxu0
    %2440 = vmatprep.subr.bf16.mxu0 %v2128
    %2441 = vmatpush1.bf16.msra.mxu0 %v2127
    %2442 = vmatprep.subr.bf16.mxu0 %v2132
    %2443 = vmatpush1.bf16.msra.mxu0 %v2131
    %2444 = vmatprep.subr.bf16.mxu0 %v2136
    %2445 = vmatpush1.bf16.msra.mxu0 %v2135
    %2446 = vmatprep.subr.bf16.mxu0 %v2140
    %2447 = vmatpush1.bf16.msra.mxu0 %v2139
    %2448 = vmatprep.subr.bf16.mxu0 %v2144
    %2449 = vmatpush1.bf16.msra.mxu0 %v2143
    %2450 = vmatprep.subr.bf16.mxu0 %v2148
    %2451 = vmatpush1.bf16.msra.mxu0 %v2147
    %2452 = vmatprep.subr.bf16.mxu0 %v2152
    %2453 = vmatpush1.bf16.msra.mxu0 %v2151
    %2454 = vmatprep.subr.bf16.mxu0 %v2156
    %2455 = vmatpush1.bf16.msra.mxu0 %v2155
    %2456 = vmatprep.subr.bf16.mxu0 %v2160
    %2457 = vmatpush1.bf16.msra.mxu0 %v2159
    %2458 = vmatprep.subr.bf16.mxu0 %v2164
    %2459 = vmatpush1.bf16.msra.mxu0 %v2163
    %2460 = vmatprep.subr.bf16.mxu0 %v2168
    %2461 = vmatpush1.bf16.msra.mxu0 %v2167
    %2462 = vmatprep.subr.bf16.mxu0 %v2172
    %2463 = vmatpush1.bf16.msra.mxu0 %v2171
    %2464 = vmatprep.subr.bf16.mxu0 %v2176
    %2465 = vmatpush1.bf16.msra.mxu0 %v2175
    %2466 = vmatprep.subr.bf16.mxu0 %v2180
    %2467 = vmatpush1.bf16.msra.mxu0 %v2179
    %2468 = vmatprep.subr.bf16.mxu0 %v2184
    %2469 = vmatpush1.bf16.msra.mxu0 %v2183
    %2470 = vmatprep.subr.bf16.mxu0 %v2188
    %2471 = vmatpush1.bf16.msra.mxu0 %v2187
    %2472 = vmatprep.mubr.bf16.mxu0 %v1525
    %2473 = vmatmul.mubr.bf16.gmra.mrb[0].mxu0 %v1524
    %v2474 = vpop.f32.mrb[0].mxu0
    %v2475 = vadd.f32 %v2434, %v2474
    %v2476 = vpop.f32.mrb[0].mxu0
    %v2477 = vadd.f32 %v2436, %v2476
    %v2478 = vpop.f32.mrb[0].mxu0
    %v2479 = vpop.f32.mrb[0].mxu0
    %2480 = vdwg.mxu0
    %v2481 = vmax.f32 %v2393, 0.0
    %v2482 = vmax.f32 %v2395, 0.0
    %v2483 = vmax.f32 %v2475, 0.0
    %v2484 = vmax.f32 %v2477, 0.0
    %v2485 = vpack.c.bf16 %v2481, %v2481
    %v2486 = vpack.c.bf16 %v2482, %v2482
    %v2487 = vpack.c.bf16 %v2483, %v2483
    %v2488 = vpack.c.bf16 %v2484, %v2484
    %v2489 = vld [vmem:[#allocation10] sm:$0xf]
    %v2490 = vld [vmem:[#allocation10 + $0x4] sm:$0xf]
    %v2491 = vld [vmem:[#allocation10 + $0x8] sm:$0xf]
    %v2492 = vld [vmem:[#allocation10 + $0xc] sm:$0xf]
    %v2493 = vld [vmem:[#allocation10 + $0x10] sm:$0xf]
    %v2494 = vld [vmem:[#allocation10 + $0x14] sm:$0xf]
    %v2495 = vld [vmem:[#allocation10 + $0x18] sm:$0xf]
    %v2496 = vld [vmem:[#allocation10 + $0x1c] sm:$0xf]
    %v2497 = vld [vmem:[#allocation10 + $0x20] sm:$0xf]
    %v2498 = vld [vmem:[#allocation10 + $0x24] sm:$0xf]
    %v2499 = vld [vmem:[#allocation10 + $0x28] sm:$0xf]
    %v2500 = vld [vmem:[#allocation10 + $0x2c] sm:$0xf]
    %v2501 = vld [vmem:[#allocation10 + $0x30] sm:$0xf]
    %v2502 = vld [vmem:[#allocation10 + $0x34] sm:$0xf]
    %v2503 = vld [vmem:[#allocation10 + $0x38] sm:$0xf]
    %v2504 = vld [vmem:[#allocation10 + $0x3c] sm:$0xf]
    %v2505 = vld [vmem:[#allocation10 + $0x40] sm:$0xf]
    %v2506 = vld [vmem:[#allocation10 + $0x44] sm:$0xf]
    %v2507 = vld [vmem:[#allocation10 + $0x48] sm:$0xf]
    %v2508 = vld [vmem:[#allocation10 + $0x4c] sm:$0xf]
    %v2509 = vld [vmem:[#allocation10 + $0x50] sm:$0xf]
    %v2510 = vld [vmem:[#allocation10 + $0x54] sm:$0xf]
    %v2511 = vld [vmem:[#allocation10 + $0x58] sm:$0xf]
    %v2512 = vld [vmem:[#allocation10 + $0x5c] sm:$0xf]
    %v2513 = vld [vmem:[#allocation10 + $0x60] sm:$0xf]
    %v2514 = vld [vmem:[#allocation10 + $0x64] sm:$0xf]
    %v2515 = vld [vmem:[#allocation10 + $0x68] sm:$0xf]
    %v2516 = vld [vmem:[#allocation10 + $0x6c] sm:$0xf]
    %v2517 = vld [vmem:[#allocation10 + $0x70] sm:$0xf]
    %v2518 = vld [vmem:[#allocation10 + $0x74] sm:$0xf]
    %v2519 = vld [vmem:[#allocation10 + $0x78] sm:$0xf]
    %v2520 = vld [vmem:[#allocation10 + $0x7c] sm:$0xf]
    %v2521 = vld [vmem:[#allocation10 + $0x80] sm:$0xf]
    %v2522 = vld [vmem:[#allocation10 + $0x84] sm:$0xf]
    %v2523 = vld [vmem:[#allocation10 + $0x88] sm:$0xf]
    %v2524 = vld [vmem:[#allocation10 + $0x8c] sm:$0xf]
    %v2525 = vld [vmem:[#allocation10 + $0x90] sm:$0xf]
    %v2526 = vld [vmem:[#allocation10 + $0x94] sm:$0xf]
    %v2527 = vld [vmem:[#allocation10 + $0x98] sm:$0xf]
    %v2528 = vld [vmem:[#allocation10 + $0x9c] sm:$0xf]
    %v2529 = vld [vmem:[#allocation10 + $0xa0] sm:$0xf]
    %v2530 = vld [vmem:[#allocation10 + $0xa4] sm:$0xf]
    %v2531 = vld [vmem:[#allocation10 + $0xa8] sm:$0xf]
    %v2532 = vld [vmem:[#allocation10 + $0xac] sm:$0xf]
    %v2533 = vld [vmem:[#allocation10 + $0xb0] sm:$0xf]
    %v2534 = vld [vmem:[#allocation10 + $0xb4] sm:$0xf]
    %v2535 = vld [vmem:[#allocation10 + $0xb8] sm:$0xf]
    %v2536 = vld [vmem:[#allocation10 + $0xbc] sm:$0xf]
    %v2537 = vld [vmem:[#allocation10 + $0xc0] sm:$0xf]
    %v2538 = vld [vmem:[#allocation10 + $0xc4] sm:$0xf]
    %v2539 = vld [vmem:[#allocation10 + $0xc8] sm:$0xf]
    %v2540 = vld [vmem:[#allocation10 + $0xcc] sm:$0xf]
    %v2541 = vld [vmem:[#allocation10 + $0xd0] sm:$0xf]
    %v2542 = vld [vmem:[#allocation10 + $0xd4] sm:$0xf]
    %v2543 = vld [vmem:[#allocation10 + $0xd8] sm:$0xf]
    %v2544 = vld [vmem:[#allocation10 + $0xdc] sm:$0xf]
    %v2545 = vld [vmem:[#allocation10 + $0xe0] sm:$0xf]
    %v2546 = vld [vmem:[#allocation10 + $0xe4] sm:$0xf]
    %v2547 = vld [vmem:[#allocation10 + $0xe8] sm:$0xf]
    %v2548 = vld [vmem:[#allocation10 + $0xec] sm:$0xf]
    %v2549 = vld [vmem:[#allocation10 + $0xf0] sm:$0xf]
    %v2550 = vld [vmem:[#allocation10 + $0xf4] sm:$0xf]
    %v2551 = vld [vmem:[#allocation10 + $0xf8] sm:$0xf]
    %v2552 = vld [vmem:[#allocation10 + $0xfc] sm:$0xf]
    %v2553 = vld [vmem:[%s6] sm:$0x1]
    %v2555 = vlaneseq
    %v2556 = vshrl.u32 %v2555, 7
    %v2557 = vsub.s32 0, %v2556
    %v2558 = vrot.slane %v2553, %v2557
    %v2624 = vunpack.c.l.b16 %v2489
    %v2625 = vunpack.c.l.b16 %v2490
    %v2626 = vunpack.c.l.b16 %v2491
    %v2627 = vunpack.c.l.b16 %v2492
    %v2628 = vunpack.c.l.b16 %v2493
    %v2629 = vunpack.c.l.b16 %v2494
    %v2630 = vunpack.c.l.b16 %v2495
    %v2631 = vunpack.c.l.b16 %v2496
    %v2632 = vunpack.c.l.b16 %v2497
    %v2633 = vunpack.c.l.b16 %v2498
    %v2634 = vunpack.c.l.b16 %v2499
    %v2635 = vunpack.c.l.b16 %v2500
    %v2636 = vunpack.c.l.b16 %v2501
    %v2637 = vunpack.c.l.b16 %v2502
    %v2638 = vunpack.c.l.b16 %v2503
    %v2639 = vunpack.c.l.b16 %v2504
    %v2640 = vunpack.c.l.b16 %v2505
    %v2641 = vunpack.c.l.b16 %v2506
    %v2642 = vunpack.c.l.b16 %v2507
    %v2643 = vunpack.c.l.b16 %v2508
    %v2644 = vunpack.c.l.b16 %v2509
    %v2645 = vunpack.c.l.b16 %v2510
    %v2646 = vunpack.c.l.b16 %v2511
    %v2647 = vunpack.c.l.b16 %v2512
    %v2648 = vunpack.c.l.b16 %v2513
    %v2649 = vunpack.c.l.b16 %v2514
    %v2650 = vunpack.c.l.b16 %v2515
    %v2651 = vunpack.c.l.b16 %v2516
    %v2652 = vunpack.c.l.b16 %v2517
    %v2653 = vunpack.c.l.b16 %v2518
    %v2654 = vunpack.c.l.b16 %v2519
    %v2655 = vunpack.c.l.b16 %v2520
    %v2656 = vunpack.c.l.b16 %v2521
    %v2657 = vunpack.c.l.b16 %v2522
    %v2658 = vunpack.c.l.b16 %v2523
    %v2659 = vunpack.c.l.b16 %v2524
    %v2660 = vunpack.c.l.b16 %v2525
    %v2661 = vunpack.c.l.b16 %v2526
    %v2662 = vunpack.c.l.b16 %v2527
    %v2663 = vunpack.c.l.b16 %v2528
    %v2664 = vunpack.c.l.b16 %v2529
    %v2665 = vunpack.c.l.b16 %v2530
    %v2666 = vunpack.c.l.b16 %v2531
    %v2667 = vunpack.c.l.b16 %v2532
    %v2668 = vunpack.c.l.b16 %v2533
    %v2669 = vunpack.c.l.b16 %v2534
    %v2670 = vunpack.c.l.b16 %v2535
    %v2671 = vunpack.c.l.b16 %v2536
    %v2672 = vunpack.c.l.b16 %v2537
    %v2673 = vunpack.c.l.b16 %v2538
    %v2674 = vunpack.c.l.b16 %v2539
    %v2675 = vunpack.c.l.b16 %v2540
    %v2676 = vunpack.c.l.b16 %v2541
    %v2677 = vunpack.c.l.b16 %v2542
    %v2678 = vunpack.c.l.b16 %v2543
    %v2679 = vunpack.c.l.b16 %v2544
    %v2680 = vunpack.c.l.b16 %v2545
    %v2681 = vunpack.c.l.b16 %v2546
    %v2682 = vunpack.c.l.b16 %v2547
    %v2683 = vunpack.c.l.b16 %v2548
    %v2684 = vunpack.c.l.b16 %v2549
    %v2685 = vunpack.c.l.b16 %v2550
    %v2686 = vunpack.c.l.b16 %v2551
    %v2687 = vunpack.c.l.b16 %v2552
    %v2688 = vpack.c.b16 %v2625, %v2624
    %v2689 = vpack.c.b16 %v2627, %v2626
    %v2690 = vpack.c.b16 %v2629, %v2628
    %v2691 = vpack.c.b16 %v2631, %v2630
    %v2692 = vpack.c.b16 %v2633, %v2632
    %v2693 = vpack.c.b16 %v2635, %v2634
    %v2694 = vpack.c.b16 %v2637, %v2636
    %v2695 = vpack.c.b16 %v2639, %v2638
    %v2696 = vpack.c.b16 %v2641, %v2640
    %v2697 = vpack.c.b16 %v2643, %v2642
    %v2698 = vpack.c.b16 %v2645, %v2644
    %v2699 = vpack.c.b16 %v2647, %v2646
    %v2700 = vpack.c.b16 %v2649, %v2648
    %v2701 = vpack.c.b16 %v2651, %v2650
    %v2702 = vpack.c.b16 %v2653, %v2652
    %v2703 = vpack.c.b16 %v2655, %v2654
    %v2704 = vpack.c.b16 %v2657, %v2656
    %v2705 = vpack.c.b16 %v2659, %v2658
    %v2706 = vpack.c.b16 %v2661, %v2660
    %v2707 = vpack.c.b16 %v2663, %v2662
    %v2708 = vpack.c.b16 %v2665, %v2664
    %v2709 = vpack.c.b16 %v2667, %v2666
    %v2710 = vpack.c.b16 %v2669, %v2668
    %v2711 = vpack.c.b16 %v2671, %v2670
    %v2712 = vpack.c.b16 %v2673, %v2672
    %v2713 = vpack.c.b16 %v2675, %v2674
    %v2714 = vpack.c.b16 %v2677, %v2676
    %v2715 = vpack.c.b16 %v2679, %v2678
    %v2716 = vpack.c.b16 %v2681, %v2680
    %v2717 = vpack.c.b16 %v2683, %v2682
    %v2718 = vpack.c.b16 %v2685, %v2684
    %v2719 = vpack.c.b16 %v2687, %v2686
    %2752 = vmatprep.subr.bf16.mxu0 0
    %2753 = vmatpush1.bf16.msra.mxu0 %v2688
    %2754 = vmatprep.subr.bf16.mxu0 0
    %2755 = vmatpush1.bf16.msra.mxu0 %v2689
    %2756 = vmatprep.subr.bf16.mxu0 0
    %2757 = vmatpush1.bf16.msra.mxu0 %v2690
    %2758 = vmatprep.subr.bf16.mxu0 0
    %2759 = vmatpush1.bf16.msra.mxu0 %v2691
    %2760 = vmatprep.subr.bf16.mxu0 0
    %2761 = vmatpush1.bf16.msra.mxu0 %v2692
    %2762 = vmatprep.subr.bf16.mxu0 0
    %2763 = vmatpush1.bf16.msra.mxu0 %v2693
    %2764 = vmatprep.subr.bf16.mxu0 0
    %2765 = vmatpush1.bf16.msra.mxu0 %v2694
    %2766 = vmatprep.subr.bf16.mxu0 0
    %2767 = vmatpush1.bf16.msra.mxu0 %v2695
    %2768 = vmatprep.subr.bf16.mxu0 0
    %2769 = vmatpush1.bf16.msra.mxu0 %v2696
    %2770 = vmatprep.subr.bf16.mxu0 0
    %2771 = vmatpush1.bf16.msra.mxu0 %v2697
    %2772 = vmatprep.subr.bf16.mxu0 0
    %2773 = vmatpush1.bf16.msra.mxu0 %v2698
    %2774 = vmatprep.subr.bf16.mxu0 0
    %2775 = vmatpush1.bf16.msra.mxu0 %v2699
    %2776 = vmatprep.subr.bf16.mxu0 0
    %2777 = vmatpush1.bf16.msra.mxu0 %v2700
    %2778 = vmatprep.subr.bf16.mxu0 0
    %2779 = vmatpush1.bf16.msra.mxu0 %v2701
    %2780 = vmatprep.subr.bf16.mxu0 0
    %2781 = vmatpush1.bf16.msra.mxu0 %v2702
    %2782 = vmatprep.subr.bf16.mxu0 0
    %2783 = vmatpush1.bf16.msra.mxu0 %v2703
    %2784 = vmatprep.mubr.bf16.mxu0 %v2486
    %2785 = vmatmul.mubr.bf16.gmra.mrb[0].mxu0 %v2485
    %v2786 = vpop.f32.mrb[0].mxu0
    %v2787 = vadd.f32 %v2558, %v2786
    %v2788 = vpop.f32.mrb[0].mxu0
    %v2789 = vpop.f32.mrb[0].mxu0
    %v2790 = vpop.f32.mrb[0].mxu0
    %2791 = vdwg.mxu0
    %2792 = vmatprep.subr.bf16.mxu0 0
    %2793 = vmatpush1.bf16.msra.mxu0 %v2704
    %2794 = vmatprep.subr.bf16.mxu0 0
    %2795 = vmatpush1.bf16.msra.mxu0 %v2705
    %2796 = vmatprep.subr.bf16.mxu0 0
    %2797 = vmatpush1.bf16.msra.mxu0 %v2706
    %2798 = vmatprep.subr.bf16.mxu0 0
    %2799 = vmatpush1.bf16.msra.mxu0 %v2707
    %2800 = vmatprep.subr.bf16.mxu0 0
    %2801 = vmatpush1.bf16.msra.mxu0 %v2708
    %2802 = vmatprep.subr.bf16.mxu0 0
    %2803 = vmatpush1.bf16.msra.mxu0 %v2709
    %2804 = vmatprep.subr.bf16.mxu0 0
    %2805 = vmatpush1.bf16.msra.mxu0 %v2710
    %2806 = vmatprep.subr.bf16.mxu0 0
    %2807 = vmatpush1.bf16.msra.mxu0 %v2711
    %2808 = vmatprep.subr.bf16.mxu0 0
    %2809 = vmatpush1.bf16.msra.mxu0 %v2712
    %2810 = vmatprep.subr.bf16.mxu0 0
    %2811 = vmatpush1.bf16.msra.mxu0 %v2713
    %2812 = vmatprep.subr.bf16.mxu0 0
    %2813 = vmatpush1.bf16.msra.mxu0 %v2714
    %2814 = vmatprep.subr.bf16.mxu0 0
    %2815 = vmatpush1.bf16.msra.mxu0 %v2715
    %2816 = vmatprep.subr.bf16.mxu0 0
    %2817 = vmatpush1.bf16.msra.mxu0 %v2716
    %2818 = vmatprep.subr.bf16.mxu0 0
    %2819 = vmatpush1.bf16.msra.mxu0 %v2717
    %2820 = vmatprep.subr.bf16.mxu0 0
    %2821 = vmatpush1.bf16.msra.mxu0 %v2718
    %2822 = vmatprep.subr.bf16.mxu0 0
    %2823 = vmatpush1.bf16.msra.mxu0 %v2719
    %2824 = vmatprep.mubr.bf16.mxu0 %v2488
    %2825 = vmatmul.mubr.bf16.gmra.mrb[0].mxu0 %v2487
    %v2826 = vpop.f32.mrb[0].mxu0
    %v2827 = vadd.f32 %v2787, %v2826
    %v2828 = vpop.f32.mrb[0].mxu0
    %v2829 = vpop.f32.mrb[0].mxu0
    %v2830 = vpop.f32.mrb[0].mxu0
    %2831 = vdwg.mxu0
    %v2832 = vtanh.pop %v2827
    %2833 = vst [vmem:[#allocation13] sm:$0xff] %v2832
    // Predicated region
    $region54: #{actor_forward.1} parent=1 // pred_check
      _
    $region55: #{actor_forward.1} parent=1 // pred_check_branch
      %2835 = sbr.rel (0) target = $region57
    $region56: #{actor_forward.1} parent=1 // pred_region
      %s2837 = ssub.s32 128, 128
      %2838 = vsyncadd [#allocation4], %s2837
      %s2840 = sshll.u32 [#allocation13], 4
      %s2841 = int_to_ptr.vmem [resolvable:$true] %s2840
      %2843 = dma.vmem_to_hbm [thread:$0]  %s2841, 128, %s7, [#allocation4]
    $region57: #{actor_forward.1} parent=1 // pred_fallthru
      _
    // Predicated region
    $region58: #{actor_forward.1} parent=1 // pred_check
      _
    $region59: #{actor_forward.1} parent=1 // pred_check_branch
      %2845 = sbr.rel (0) target = $region61
    $region60: #{actor_forward.1} parent=1 // pred_region
      %2846 = dma.done [#allocation4], 128
    $region61: #{actor_forward.1} parent=1 // pred_fallthru
      _
    %2847 = vsyncpa [#allocation3], 1
    %2848 = vsyncpa [#allocation6], 1
    %2849 = vsyncpa [#allocation9], 1
    %2850 = vsyncpa [#allocation12], 1
    %2851 = vsyncpa [#allocation4], 1

</llo_original>
